<compile_context>
chip_gen: v7x
topology: tpu7x:2x2x1
jax: 0.10.0
libtpu: 0.0.40
codegen_flags: <defaults>
</compile_context>

<pallas_src>
import numpy as np
import jax
import jax.numpy as jnp
from jax.experimental import pallas as pl
from jax.experimental.pallas import tpu as pltpu


# ----------------------------- host-side helpers -----------------------------

def get_fourier_coord(N, l):
    """Centered (fftshift-convention) radial spatial-frequency grid (N, N)."""
    dx = l / N
    fmax = 1.0 / (2.0 * dx)
    f = np.linspace(-fmax, fmax, N)                  # even N -> never exactly 0
    fx, fy = np.meshgrid(f, f, indexing="ij")
    k = 2.0 * np.pi * np.sqrt(fx * fx + fy * fy)
    return k, (fx, fy)


def pad_double(y):
    """Zero-pad the last two dims from (h, w) to (2h, 2w), centered. (reference only)"""
    h, w = y.shape[-2], y.shape[-1]
    pad = [(0, 0)] * (y.ndim - 2) + [(h // 2, h // 2), (w // 2, w // 2)]
    return jnp.pad(y, pad)


def crop_half(x):
    """Crop the center (H/2, W/2) region of the last two dims. (reference only)"""
    H, W = x.shape[-2], x.shape[-1]
    return x[..., H // 4:H // 4 + H // 2, W // 4:W // 4 + W // 2]


def shifted_dft_matrices(N):
    """Complex A, G (N, N) with (even N, shifts on the last two axes):
        fft2(ifftshift(y))  == A @ y @ A.T
        fftshift(ifft2(W))  == G @ W @ G.T
    """
    n = np.arange(N)
    F = np.exp(-2j * np.pi * np.outer(n, n) / N)      # forward DFT matrix
    P = np.zeros((N, N), np.float64)
    P[n, (n + N // 2) % N] = 1.0                      # (i)fftshift permutation (even N)
    A = F @ P
    G = P @ np.conj(F) / N
    return A, G


# ------------------------------- kernel --------------------------------------

def _wiener_kernel(y_ref, hre_ref, him_ref,
                   ascat_ref,
                   astre_ref, astim_ref, astsum_ref,
                   grcat_ref,
                   gtre_ref, gtim_ref,
                   reg_ref, out_ref,
                   lhs_acc, rre_acc, rim_acc):
    # y_ref      : (1, 1, h, h)  bf16   un-padded image, one (batch, channel)
    # h*_ref     : (1, 1, N, N)  bf16   OTF real / imag parts for this channel
    # ascat_ref  : (2N, h)       bf16   [A_s.re ; A_s.im],  A_s = A[:, h/2:3h/2]
    # ast*_ref   : (h, N)        bf16   A_s^T re / im / (re+im)  (Karatsuba)
    # grcat_ref  : (2h, N)       bf16   [G_r.re ; G_r.im], G_r = G[h/2:3h/2, :]
    # gt*_ref    : (N, Wp)       bf16   G_r^T, zero-padded to 128 lanes
    # reg_ref    : (N, N)        f32    C * lam * (k.mean()/k)**order
    # out_ref    : (1, 1, h, Wp) f32    lane-dense output (sliced to w outside)
    # *_acc      : (N, N)        f32    VMEM accumulators over the channel axis
    c = pl.program_id(1)
    last_c = pl.num_programs(1) - 1
    N = reg_ref.shape[0]
    h = y_ref.shape[2]

    def mm(a, b):
        return jnp.dot(a, b, preferred_element_type=jnp.float32)

    # ---- forward, left transform: one M-stacked (2N,h)@(h,h) product ----
    yc = y_ref[0, 0]                                  # (h, h) bf16
    T_cat = mm(ascat_ref[...], yc)                    # (2N, h) f32
    T_re = T_cat[:N, :]
    T_im = T_cat[N:, :]
    Tr = T_re.astype(jnp.bfloat16)
    Ti = T_im.astype(jnp.bfloat16)
    Ts = (T_re + T_im).astype(jnp.bfloat16)

    # ---- forward, right transform: Y = T @ A_s^T (Karatsuba, 3 matmuls) ----
    P1 = mm(Tr, astre_ref[...])                       # (N, N) f32
    P2 = mm(Ti, astim_ref[...])
    P3 = mm(Ts, astsum_ref[...])
    Y_re = P1 - P2
    Y_im = P3 - P1 - P2

    # ---- per-channel Wiener terms (VPU, hides under MXU) ----
    hre = hre_ref[0, 0].astype(jnp.float32)
    him = him_ref[0, 0].astype(jnp.float32)
    d_re = hre * Y_re + him * Y_im                    # Re(conj(H) * Y)
    d_im = hre * Y_im - him * Y_re                    # Im(conj(H) * Y)
    d_l = hre * hre + him * him                       # |H|^2

    @pl.when(c == 0)
    def _():
        rre_acc[...] = d_re
        rim_acc[...] = d_im
        lhs_acc[...] = reg_ref[...] + d_l             # reg pre-scaled by C

    @pl.when(c > 0)
    def _():
        rre_acc[...] += d_re
        rim_acc[...] += d_im
        lhs_acc[...] += d_l

    # ---- finalize: Wiener division + inverse transform + crop + store ----
    @pl.when(c == last_c)
    def _():
        inv = pl.reciprocal(lhs_acc[...], approx=True)
        W_re = rre_acc[...] * inv
        W_im = rim_acc[...] * inv
        Wr = W_re.astype(jnp.bfloat16)
        Wi = W_im.astype(jnp.bfloat16)

        # inverse, left transform with crop folded in: U = G_r @ W,
        # 4-multiply complex form via the M-stacked Gr_cat (2 matmuls, M=2h)
        QA = mm(grcat_ref[...], Wr)                   # (2h, N): [Gre@Wr ; Gim@Wr]
        QB = mm(grcat_ref[...], Wi)                   # (2h, N): [Gre@Wi ; Gim@Wi]
        U_re = QA[:h, :] - QB[h:, :]
        U_im = QB[:h, :] + QA[h:, :]

        # inverse, right transform (real part only), crop + 128-lane pad folded
        # into the G^T column slice -> lane-dense unmasked store
        X = (mm(U_re.astype(jnp.bfloat16), gtre_ref[...])
             - mm(U_im.astype(jnp.bfloat16), gtim_ref[...]))   # (h, Wp)
        out_ref[0, 0, :, :] = X


# ------------------------------- wrapper --------------------------------------

def wiener_batched_pallas(y, H, lam, order, k_centered):
    """y: (B, C, h, w) float32; H: (B, C, 2h, 2w) complex64.
    Returns (B, 1, h, w) float32 (matches WienerBatched.forward)."""
    B, C, h, w = y.shape
    N = 2 * h
    assert h == w and H.shape == (B, C, N, N)
    Wp = ((w + 127) // 128) * 128                    # lane-dense output width

    A, G = shifted_dft_matrices(N)
    s = h // 2
    A_s = A[:, s:s + h]          # (N, h): only DFT cols hitting non-zero pad rows
    G_r = G[s:s + h, :]          # (h, N): only inverse rows surviving crop_half
    GT = G_r.T                   # (N, w)

    bf = jnp.bfloat16
    As_cat = jnp.asarray(np.concatenate([A_s.real, A_s.imag], axis=0), bf)   # (2N, h)
    AsT = A_s.T
    AsT_re = jnp.asarray(AsT.real, bf)
    AsT_im = jnp.asarray(AsT.imag, bf)
    AsT_sum = jnp.asarray(AsT.real + AsT.imag, bf)   # Karatsuba (Br + Bi), exact in f64
    Gr_cat = jnp.asarray(np.concatenate([G_r.real, G_r.imag], axis=0), bf)   # (2h, N)
    GTp_re = np.zeros((N, Wp), np.float64)
    GTp_im = np.zeros((N, Wp), np.float64)
    GTp_re[:, :w] = GT.real
    GTp_im[:, :w] = GT.imag
    GTc_re = jnp.asarray(GTp_re, bf)
    GTc_im = jnp.asarray(GTp_im, bf)

    # regularizer, pre-scaled by C (it is summed over the channel axis in the
    # reference):  C * lam * (k.mean()/k)**order on the ifftshift'ed freq grid
    kf = np.fft.ifftshift(k_centered)
    reg = jnp.asarray((C * lam * (kf.mean() / kf) ** order).astype(np.float32))

    y_bf = y.astype(bf)                              # pad folded into A_s: no y padding
    H_re = jnp.real(H).astype(bf)
    H_im = jnp.imag(H).astype(bf)

    y_spec = pl.BlockSpec((1, 1, h, h), lambda b, c: (b, c, 0, 0))
    H_spec = pl.BlockSpec((1, 1, N, N), lambda b, c: (b, c, 0, 0))

    def const2d(shape):
        return pl.BlockSpec(shape, lambda b, c: (0, 0))

    out = pl.pallas_call(
        _wiener_kernel,
        out_shape=jax.ShapeDtypeStruct((B, 1, h, Wp), jnp.float32),
        grid_spec=pltpu.PrefetchScalarGridSpec(
            num_scalar_prefetch=0,
            grid=(B, C),                              # channel reduction innermost
            in_specs=[y_spec, H_spec, H_spec,
                      const2d((2 * N, h)),
                      const2d((h, N)), const2d((h, N)), const2d((h, N)),
                      const2d((2 * h, N)),
                      const2d((N, Wp)), const2d((N, Wp)),
                      const2d((N, N))],
            out_specs=pl.BlockSpec((1, 1, h, Wp), lambda b, c: (b, 0, 0, 0)),
            scratch_shapes=[pltpu.VMEM((N, N), jnp.float32),   # lhs accumulator
                            pltpu.VMEM((N, N), jnp.float32),   # rhs_re accumulator
                            pltpu.VMEM((N, N), jnp.float32)],  # rhs_im accumulator
        ),
        compiler_params=pltpu.CompilerParams(
            dimension_semantics=("parallel", "arbitrary")),
    )(y_bf, H_re, H_im,
      As_cat, AsT_re, AsT_im, AsT_sum,
      Gr_cat, GTc_re, GTc_im, reg)

    return out[..., :w]


# ------------------------------ reference -------------------------------------

def wiener_batched_ref(y, H, lam, order, k_centered):
    """Pure-JAX mirror of the PyTorch forward (uses jnp.fft)."""
    ypad = pad_double(y)
    k = jnp.asarray(np.fft.ifftshift(k_centered))[None, None]
    Ht = jnp.conj(H)
    HtH = jnp.abs(H) ** 2
    rhs = (Ht * jnp.fft.fft2(jnp.fft.ifftshift(ypad, axes=(-2, -1)))
           ).sum(axis=-3)[:, None]
    lhs = (HtH + lam * (k.mean() / k) ** order).sum(axis=-3)[:, None]
    x = jnp.fft.fftshift(jnp.fft.ifft2(rhs / lhs), axes=(-2, -1)).real
    return crop_half(x)


# --------------------------------- main ----------------------------------------

if __name__ == "__main__":
    B, C, h = 2, 4, 16
    N = 2 * h
    lam, order = 0.01, 1

    key = jax.random.PRNGKey(0)
    k1, k2, k3 = jax.random.split(key, 3)
    y = jax.random.normal(k1, (B, C, h, h), jnp.float32)
    H = (jax.random.normal(k2, (B, C, N, N), jnp.float32)
         + 1j * jax.random.normal(k3, (B, C, N, N), jnp.float32)
         ).astype(jnp.complex64)
    # module builds k at the padded size (N=160 originally); synthetic N here
    k_centered, _ = get_fourier_coord(N=N, l=0.0064)

    out = wiener_batched_pallas(y, H, lam, order, k_centered)
    out = jax.block_until_ready(out)

    ref = wiener_batched_ref(y, H, lam, order, k_centered)
    assert out.shape == (B, 1, h, h)
    rel = float(jnp.linalg.norm(out - ref) / (jnp.linalg.norm(ref) + 1e-8))
    assert rel < 5e-2, f"relative error too large: {rel}"
    print("KERNEL_OK")
</pallas_src>

<mosaic_0001>
module attributes {stable_mosaic.version = 11 : i64} {
  func.func @_wiener_kernel(%arg0: i32, %arg1: i32, %arg2: memref<1x1x16x16xbf16, #tpu.memory_space<vmem>>, %arg3: memref<1x1x32x32xbf16, #tpu.memory_space<vmem>>, %arg4: memref<1x1x32x32xbf16, #tpu.memory_space<vmem>>, %arg5: memref<64x16xbf16, #tpu.memory_space<vmem>>, %arg6: memref<16x32xbf16, #tpu.memory_space<vmem>>, %arg7: memref<16x32xbf16, #tpu.memory_space<vmem>>, %arg8: memref<16x32xbf16, #tpu.memory_space<vmem>>, %arg9: memref<32x32xbf16, #tpu.memory_space<vmem>>, %arg10: memref<32x128xbf16, #tpu.memory_space<vmem>>, %arg11: memref<32x128xbf16, #tpu.memory_space<vmem>>, %arg12: memref<32x32xf32, #tpu.memory_space<vmem>>, %arg13: memref<1x1x16x128xf32, #tpu.memory_space<vmem>>, %arg14: memref<32x32xf32, #tpu.memory_space<vmem>>, %arg15: memref<32x32xf32, #tpu.memory_space<vmem>>, %arg16: memref<32x32xf32, #tpu.memory_space<vmem>>) attributes {dimension_semantics = [#tpu.dimension_semantics<parallel>, #tpu.dimension_semantics<arbitrary>], iteration_bounds = array<i64: 2, 4>, scalar_prefetch = 0 : i64, scratch_operands = 3 : i64, tpu.core_type = #tpu.core_type<tc>, window_params = [{transform_indices = @transform_0, window_bounds = array<i64: 1, 1, 16, 16>}, {transform_indices = @transform_1, window_bounds = array<i64: 1, 1, 32, 32>}, {transform_indices = @transform_2, window_bounds = array<i64: 1, 1, 32, 32>}, {pipeline_mode = #tpu.pipeline_mode<synchronous>, transform_indices = @transform_3, window_bounds = array<i64: 64, 16>}, {pipeline_mode = #tpu.pipeline_mode<synchronous>, transform_indices = @transform_4, window_bounds = array<i64: 16, 32>}, {pipeline_mode = #tpu.pipeline_mode<synchronous>, transform_indices = @transform_5, window_bounds = array<i64: 16, 32>}, {pipeline_mode = #tpu.pipeline_mode<synchronous>, transform_indices = @transform_6, window_bounds = array<i64: 16, 32>}, {pipeline_mode = #tpu.pipeline_mode<synchronous>, transform_indices = @transform_7, window_bounds = array<i64: 32, 32>}, {pipeline_mode = #tpu.pipeline_mode<synchronous>, transform_indices = @transform_8, window_bounds = array<i64: 32, 128>}, {pipeline_mode = #tpu.pipeline_mode<synchronous>, transform_indices = @transform_9, window_bounds = array<i64: 32, 128>}, {pipeline_mode = #tpu.pipeline_mode<synchronous>, transform_indices = @transform_10, window_bounds = array<i64: 32, 32>}, {transform_indices = @transform_11, window_bounds = array<i64: 1, 1, 16, 128>}]} {
    %c0 = arith.constant 0 : index
    %c0_0 = arith.constant 0 : index
    %c0_1 = arith.constant 0 : index
    %c0_2 = arith.constant 0 : index
    %0 = vector.load %arg2[%c0, %c0_0, %c0_1, %c0_2] : memref<1x1x16x16xbf16, #tpu.memory_space<vmem>>, vector<1x1x16x16xbf16>
    %1 = vector.shape_cast %0 : vector<1x1x16x16xbf16> to vector<16x16xbf16>
    %c0_3 = arith.constant 0 : index
    %c0_4 = arith.constant 0 : index
    %2 = vector.load %arg5[%c0_3, %c0_4] : memref<64x16xbf16, #tpu.memory_space<vmem>>, vector<64x16xbf16>
    %cst = arith.constant dense<0.000000e+00> : vector<64x16xf32>
    %3 = tpu.matmul %2, %1, %cst {dimension_numbers = #tpu.dot_dimension_numbers<[1], [0], [0], [1], [0, 0, 1, 1], [], []>} : vector<64x16xbf16>, vector<16x16xbf16>, vector<64x16xf32> -> vector<64x16xf32>
    %4 = vector.extract_strided_slice %3 {offsets = [0, 0], sizes = [32, 16], strides = [1, 1]} : vector<64x16xf32> to vector<32x16xf32>
    %5 = vector.extract_strided_slice %3 {offsets = [32, 0], sizes = [32, 16], strides = [1, 1]} : vector<64x16xf32> to vector<32x16xf32>
    %6 = arith.truncf %4 : vector<32x16xf32> to vector<32x16xbf16>
    %7 = arith.truncf %5 : vector<32x16xf32> to vector<32x16xbf16>
    %8 = arith.addf %4, %5 : vector<32x16xf32>
    %9 = arith.truncf %8 : vector<32x16xf32> to vector<32x16xbf16>
    %c0_5 = arith.constant 0 : index
    %c0_6 = arith.constant 0 : index
    %10 = vector.load %arg6[%c0_5, %c0_6] : memref<16x32xbf16, #tpu.memory_space<vmem>>, vector<16x32xbf16>
    %cst_7 = arith.constant dense<0.000000e+00> : vector<32x32xf32>
    %11 = tpu.matmul %6, %10, %cst_7 {dimension_numbers = #tpu.dot_dimension_numbers<[1], [0], [0], [1], [0, 0, 1, 1], [], []>} : vector<32x16xbf16>, vector<16x32xbf16>, vector<32x32xf32> -> vector<32x32xf32>
    %c0_8 = arith.constant 0 : index
    %c0_9 = arith.constant 0 : index
    %12 = vector.load %arg7[%c0_8, %c0_9] : memref<16x32xbf16, #tpu.memory_space<vmem>>, vector<16x32xbf16>
    %cst_10 = arith.constant dense<0.000000e+00> : vector<32x32xf32>
    %13 = tpu.matmul %7, %12, %cst_10 {dimension_numbers = #tpu.dot_dimension_numbers<[1], [0], [0], [1], [0, 0, 1, 1], [], []>} : vector<32x16xbf16>, vector<16x32xbf16>, vector<32x32xf32> -> vector<32x32xf32>
    %c0_11 = arith.constant 0 : index
    %c0_12 = arith.constant 0 : index
    %14 = vector.load %arg8[%c0_11, %c0_12] : memref<16x32xbf16, #tpu.memory_space<vmem>>, vector<16x32xbf16>
    %cst_13 = arith.constant dense<0.000000e+00> : vector<32x32xf32>
    %15 = tpu.matmul %9, %14, %cst_13 {dimension_numbers = #tpu.dot_dimension_numbers<[1], [0], [0], [1], [0, 0, 1, 1], [], []>} : vector<32x16xbf16>, vector<16x32xbf16>, vector<32x32xf32> -> vector<32x32xf32>
    %16 = arith.subf %11, %13 : vector<32x32xf32>
    %17 = arith.subf %15, %11 : vector<32x32xf32>
    %18 = arith.subf %17, %13 : vector<32x32xf32>
    %c0_14 = arith.constant 0 : index
    %c0_15 = arith.constant 0 : index
    %c0_16 = arith.constant 0 : index
    %c0_17 = arith.constant 0 : index
    %19 = vector.load %arg3[%c0_14, %c0_15, %c0_16, %c0_17] : memref<1x1x32x32xbf16, #tpu.memory_space<vmem>>, vector<1x1x32x32xbf16>
    %20 = vector.shape_cast %19 : vector<1x1x32x32xbf16> to vector<32x32xbf16>
    %21 = arith.extf %20 : vector<32x32xbf16> to vector<32x32xf32>
    %c0_18 = arith.constant 0 : index
    %c0_19 = arith.constant 0 : index
    %c0_20 = arith.constant 0 : index
    %c0_21 = arith.constant 0 : index
    %22 = vector.load %arg4[%c0_18, %c0_19, %c0_20, %c0_21] : memref<1x1x32x32xbf16, #tpu.memory_space<vmem>>, vector<1x1x32x32xbf16>
    %23 = vector.shape_cast %22 : vector<1x1x32x32xbf16> to vector<32x32xbf16>
    %24 = arith.extf %23 : vector<32x32xbf16> to vector<32x32xf32>
    %25 = arith.mulf %21, %16 : vector<32x32xf32>
    %26 = arith.mulf %24, %18 : vector<32x32xf32>
    %27 = arith.addf %25, %26 : vector<32x32xf32>
    %28 = arith.mulf %21, %18 : vector<32x32xf32>
    %29 = arith.mulf %24, %16 : vector<32x32xf32>
    %30 = arith.subf %28, %29 : vector<32x32xf32>
    %31 = arith.mulf %21, %21 : vector<32x32xf32>
    %32 = arith.mulf %24, %24 : vector<32x32xf32>
    %33 = arith.addf %31, %32 : vector<32x32xf32>
    %c0_i32 = arith.constant 0 : i32
    %34 = arith.cmpi eq, %arg1, %c0_i32 : i32
    %35 = arith.extui %34 : i1 to i32
    %c0_i32_22 = arith.constant 0 : i32
    %36 = arith.cmpi ne, %35, %c0_i32_22 : i32
    scf.if %36 {
      %c0_26 = arith.constant 0 : index
      %c0_27 = arith.constant 0 : index
      %43 = vector.load %arg15[%c0_26, %c0_27] : memref<32x32xf32, #tpu.memory_space<vmem>>, vector<32x32xf32>
      tpu.vector_store %arg15[%c0_26, %c0_27], %27 {strides = array<i32>} : memref<32x32xf32, #tpu.memory_space<vmem>>, vector<32x32xf32>,
      %c0_28 = arith.constant 0 : index
      %c0_29 = arith.constant 0 : index
      %44 = vector.load %arg16[%c0_28, %c0_29] : memref<32x32xf32, #tpu.memory_space<vmem>>, vector<32x32xf32>
      tpu.vector_store %arg16[%c0_28, %c0_29], %30 {strides = array<i32>} : memref<32x32xf32, #tpu.memory_space<vmem>>, vector<32x32xf32>,
      %c0_30 = arith.constant 0 : index
      %c0_31 = arith.constant 0 : index
      %45 = vector.load %arg12[%c0_30, %c0_31] : memref<32x32xf32, #tpu.memory_space<vmem>>, vector<32x32xf32>
      %46 = arith.addf %45, %33 : vector<32x32xf32>
      %c0_32 = arith.constant 0 : index
      %c0_33 = arith.constant 0 : index
      %47 = vector.load %arg14[%c0_32, %c0_33] : memref<32x32xf32, #tpu.memory_space<vmem>>, vector<32x32xf32>
      tpu.vector_store %arg14[%c0_32, %c0_33], %46 {strides = array<i32>} : memref<32x32xf32, #tpu.memory_space<vmem>>, vector<32x32xf32>,
    } else {
    }
    %c0_i32_23 = arith.constant 0 : i32
    %37 = arith.cmpi sgt, %arg1, %c0_i32_23 : i32
    %38 = arith.extui %37 : i1 to i32
    %c0_i32_24 = arith.constant 0 : i32
    %39 = arith.cmpi ne, %38, %c0_i32_24 : i32
    scf.if %39 {
      %c0_26 = arith.constant 0 : index
      %c0_27 = arith.constant 0 : index
      %43 = vector.load %arg15[%c0_26, %c0_27] : memref<32x32xf32, #tpu.memory_space<vmem>>, vector<32x32xf32>
      %44 = arith.addf %43, %27 : vector<32x32xf32>
      %c0_28 = arith.constant 0 : index
      %c0_29 = arith.constant 0 : index
      %45 = vector.load %arg15[%c0_28, %c0_29] : memref<32x32xf32, #tpu.memory_space<vmem>>, vector<32x32xf32>
      tpu.vector_store %arg15[%c0_28, %c0_29], %44 {strides = array<i32>} : memref<32x32xf32, #tpu.memory_space<vmem>>, vector<32x32xf32>,
      %c0_30 = arith.constant 0 : index
      %c0_31 = arith.constant 0 : index
      %46 = vector.load %arg16[%c0_30, %c0_31] : memref<32x32xf32, #tpu.memory_space<vmem>>, vector<32x32xf32>
      %47 = arith.addf %46, %30 : vector<32x32xf32>
      %c0_32 = arith.constant 0 : index
      %c0_33 = arith.constant 0 : index
      %48 = vector.load %arg16[%c0_32, %c0_33] : memref<32x32xf32, #tpu.memory_space<vmem>>, vector<32x32xf32>
      tpu.vector_store %arg16[%c0_32, %c0_33], %47 {strides = array<i32>} : memref<32x32xf32, #tpu.memory_space<vmem>>, vector<32x32xf32>,
      %c0_34 = arith.constant 0 : index
      %c0_35 = arith.constant 0 : index
      %49 = vector.load %arg14[%c0_34, %c0_35] : memref<32x32xf32, #tpu.memory_space<vmem>>, vector<32x32xf32>
      %50 = arith.addf %49, %33 : vector<32x32xf32>
      %c0_36 = arith.constant 0 : index
      %c0_37 = arith.constant 0 : index
      %51 = vector.load %arg14[%c0_36, %c0_37] : memref<32x32xf32, #tpu.memory_space<vmem>>, vector<32x32xf32>
      tpu.vector_store %arg14[%c0_36, %c0_37], %50 {strides = array<i32>} : memref<32x32xf32, #tpu.memory_space<vmem>>, vector<32x32xf32>,
    } else {
    }
    %c3_i32 = arith.constant 3 : i32
    %40 = arith.cmpi eq, %arg1, %c3_i32 : i32
    %41 = arith.extui %40 : i1 to i32
    %c0_i32_25 = arith.constant 0 : i32
    %42 = arith.cmpi ne, %41, %c0_i32_25 : i32
    scf.if %42 {
      %c0_26 = arith.constant 0 : index
      %c0_27 = arith.constant 0 : index
      %43 = vector.load %arg14[%c0_26, %c0_27] : memref<32x32xf32, #tpu.memory_space<vmem>>, vector<32x32xf32>
      %44 = tpu.reciprocal %43 {approx = true} : vector<32x32xf32> -> vector<32x32xf32>
      %c0_28 = arith.constant 0 : index
      %c0_29 = arith.constant 0 : index
      %45 = vector.load %arg15[%c0_28, %c0_29] : memref<32x32xf32, #tpu.memory_space<vmem>>, vector<32x32xf32>
      %46 = arith.mulf %45, %44 : vector<32x32xf32>
      %c0_30 = arith.constant 0 : index
      %c0_31 = arith.constant 0 : index
      %47 = vector.load %arg16[%c0_30, %c0_31] : memref<32x32xf32, #tpu.memory_space<vmem>>, vector<32x32xf32>
      %48 = arith.mulf %47, %44 : vector<32x32xf32>
      %49 = arith.truncf %46 : vector<32x32xf32> to vector<32x32xbf16>
      %50 = arith.truncf %48 : vector<32x32xf32> to vector<32x32xbf16>
      %c0_32 = arith.constant 0 : index
      %c0_33 = arith.constant 0 : index
      %51 = vector.load %arg9[%c0_32, %c0_33] : memref<32x32xbf16, #tpu.memory_space<vmem>>, vector<32x32xbf16>
      %cst_34 = arith.constant dense<0.000000e+00> : vector<32x32xf32>
      %52 = tpu.matmul %51, %49, %cst_34 {dimension_numbers = #tpu.dot_dimension_numbers<[1], [0], [0], [1], [0, 0, 1, 1], [], []>} : vector<32x32xbf16>, vector<32x32xbf16>, vector<32x32xf32> -> vector<32x32xf32>
      %c0_35 = arith.constant 0 : index
      %c0_36 = arith.constant 0 : index
      %53 = vector.load %arg9[%c0_35, %c0_36] : memref<32x32xbf16, #tpu.memory_space<vmem>>, vector<32x32xbf16>
      %cst_37 = arith.constant dense<0.000000e+00> : vector<32x32xf32>
      %54 = tpu.matmul %53, %50, %cst_37 {dimension_numbers = #tpu.dot_dimension_numbers<[1], [0], [0], [1], [0, 0, 1, 1], [], []>} : vector<32x32xbf16>, vector<32x32xbf16>, vector<32x32xf32> -> vector<32x32xf32>
      %55 = vector.extract_strided_slice %52 {offsets = [0, 0], sizes = [16, 32], strides = [1, 1]} : vector<32x32xf32> to vector<16x32xf32>
      %56 = vector.extract_strided_slice %54 {offsets = [16, 0], sizes = [16, 32], strides = [1, 1]} : vector<32x32xf32> to vector<16x32xf32>
      %57 = arith.subf %55, %56 : vector<16x32xf32>
      %58 = vector.extract_strided_slice %54 {offsets = [0, 0], sizes = [16, 32], strides = [1, 1]} : vector<32x32xf32> to vector<16x32xf32>
      %59 = vector.extract_strided_slice %52 {offsets = [16, 0], sizes = [16, 32], strides = [1, 1]} : vector<32x32xf32> to vector<16x32xf32>
      %60 = arith.addf %58, %59 : vector<16x32xf32>
      %61 = arith.truncf %57 : vector<16x32xf32> to vector<16x32xbf16>
      %c0_38 = arith.constant 0 : index
      %c0_39 = arith.constant 0 : index
      %62 = vector.load %arg10[%c0_38, %c0_39] : memref<32x128xbf16, #tpu.memory_space<vmem>>, vector<32x128xbf16>
      %cst_40 = arith.constant dense<0.000000e+00> : vector<16x128xf32>
      %63 = tpu.matmul %61, %62, %cst_40 {dimension_numbers = #tpu.dot_dimension_numbers<[1], [0], [0], [1], [0, 0, 1, 1], [], []>} : vector<16x32xbf16>, vector<32x128xbf16>, vector<16x128xf32> -> vector<16x128xf32>
      %64 = arith.truncf %60 : vector<16x32xf32> to vector<16x32xbf16>
      %c0_41 = arith.constant 0 : index
      %c0_42 = arith.constant 0 : index
      %65 = vector.load %arg11[%c0_41, %c0_42] : memref<32x128xbf16, #tpu.memory_space<vmem>>, vector<32x128xbf16>
      %cst_43 = arith.constant dense<0.000000e+00> : vector<16x128xf32>
      %66 = tpu.matmul %64, %65, %cst_43 {dimension_numbers = #tpu.dot_dimension_numbers<[1], [0], [0], [1], [0, 0, 1, 1], [], []>} : vector<16x32xbf16>, vector<32x128xbf16>, vector<16x128xf32> -> vector<16x128xf32>
      %67 = arith.subf %63, %66 : vector<16x128xf32>
      %c0_44 = arith.constant 0 : index
      %c0_45 = arith.constant 0 : index
      %c0_46 = arith.constant 0 : index
      %c0_47 = arith.constant 0 : index
      %68 = vector.load %arg13[%c0_44, %c0_45, %c0_46, %c0_47] : memref<1x1x16x128xf32, #tpu.memory_space<vmem>>, vector<1x1x16x128xf32>
      %69 = vector.shape_cast %68 : vector<1x1x16x128xf32> to vector<16x128xf32>
      %70 = vector.shape_cast %67 : vector<16x128xf32> to vector<1x1x16x128xf32>
      tpu.vector_store %arg13[%c0_44, %c0_45, %c0_46, %c0_47], %70 {strides = array<i32>} : memref<1x1x16x128xf32, #tpu.memory_space<vmem>>, vector<1x1x16x128xf32>,
    } else {
    }
    return
  }
  func.func @transform_0(%arg0: i32, %arg1: i32) -> (i32, i32, i32, i32) {
    %c0_i32 = arith.constant 0 : i32
    %c0_i32_0 = arith.constant 0 : i32
    %c0_i32_1 = arith.constant 0 : i32
    return %arg0, %arg1, %c0_i32, %c0_i32_0 : i32, i32, i32, i32
  }
  func.func @transform_1(%arg0: i32, %arg1: i32) -> (i32, i32, i32, i32) {
    %c0_i32 = arith.constant 0 : i32
    %c0_i32_0 = arith.constant 0 : i32
    %c0_i32_1 = arith.constant 0 : i32
    return %arg0, %arg1, %c0_i32, %c0_i32_0 : i32, i32, i32, i32
  }
  func.func @transform_2(%arg0: i32, %arg1: i32) -> (i32, i32, i32, i32) {
    %c0_i32 = arith.constant 0 : i32
    %c0_i32_0 = arith.constant 0 : i32
    %c0_i32_1 = arith.constant 0 : i32
    return %arg0, %arg1, %c0_i32, %c0_i32_0 : i32, i32, i32, i32
  }
  func.func @transform_3(%arg0: i32, %arg1: i32) -> (i32, i32) {
    %c0_i32 = arith.constant 0 : i32
    %c0_i32_0 = arith.constant 0 : i32
    %c0_i32_1 = arith.constant 0 : i32
    return %c0_i32, %c0_i32_0 : i32, i32
  }
  func.func @transform_4(%arg0: i32, %arg1: i32) -> (i32, i32) {
    %c0_i32 = arith.constant 0 : i32
    %c0_i32_0 = arith.constant 0 : i32
    %c0_i32_1 = arith.constant 0 : i32
    return %c0_i32, %c0_i32_0 : i32, i32
  }
  func.func @transform_5(%arg0: i32, %arg1: i32) -> (i32, i32) {
    %c0_i32 = arith.constant 0 : i32
    %c0_i32_0 = arith.constant 0 : i32
    %c0_i32_1 = arith.constant 0 : i32
    return %c0_i32, %c0_i32_0 : i32, i32
  }
  func.func @transform_6(%arg0: i32, %arg1: i32) -> (i32, i32) {
    %c0_i32 = arith.constant 0 : i32
    %c0_i32_0 = arith.constant 0 : i32
    %c0_i32_1 = arith.constant 0 : i32
    return %c0_i32, %c0_i32_0 : i32, i32
  }
  func.func @transform_7(%arg0: i32, %arg1: i32) -> (i32, i32) {
    %c0_i32 = arith.constant 0 : i32
    %c0_i32_0 = arith.constant 0 : i32
    %c0_i32_1 = arith.constant 0 : i32
    return %c0_i32, %c0_i32_0 : i32, i32
  }
  func.func @transform_8(%arg0: i32, %arg1: i32) -> (i32, i32) {
    %c0_i32 = arith.constant 0 : i32
    %c0_i32_0 = arith.constant 0 : i32
    %c0_i32_1 = arith.constant 0 : i32
    return %c0_i32, %c0_i32_0 : i32, i32
  }
  func.func @transform_9(%arg0: i32, %arg1: i32) -> (i32, i32) {
    %c0_i32 = arith.constant 0 : i32
    %c0_i32_0 = arith.constant 0 : i32
    %c0_i32_1 = arith.constant 0 : i32
    return %c0_i32, %c0_i32_0 : i32, i32
  }
  func.func @transform_10(%arg0: i32, %arg1: i32) -> (i32, i32) {
    %c0_i32 = arith.constant 0 : i32
    %c0_i32_0 = arith.constant 0 : i32
    %c0_i32_1 = arith.constant 0 : i32
    return %c0_i32, %c0_i32_0 : i32, i32
  }
  func.func @transform_11(%arg0: i32, %arg1: i32) -> (i32, i32, i32, i32) {
    %c0_i32 = arith.constant 0 : i32
    %c0_i32_0 = arith.constant 0 : i32
    %c0_i32_1 = arith.constant 0 : i32
    %c0_i32_2 = arith.constant 0 : i32
    return %arg0, %c0_i32, %c0_i32_0, %c0_i32_1 : i32, i32, i32, i32
  }
}

</mosaic_0001>

<llo_original>
// kernel: tpu_custom_call.1
$region0: #{tpu_custom_call.1}
  #allocation0 [shape = 'u32[]', space=smem, size = 0x4, offset = 0x4, fixed_abs, tag = 'smem constant byte address 0x4 - core index']
  #allocation1 [shape = 'u32[144,128]{1,0:T(1,128)}', space=vmem, size = 0x12000, scoped, tag = 'internal scratch']
  #allocation2 [shape = 'f32[32,32]{1,0:T(8,128)}', space=vmem, size = 0x4000, scoped, tag = 'scratch operand']
  #allocation3 [shape = 'f32[32,32]{1,0:T(8,128)}', space=vmem, size = 0x4000, scoped, tag = 'scratch operand']
  #allocation4 [shape = 'f32[32,32]{1,0:T(8,128)}', space=vmem, size = 0x4000, scoped, tag = 'scratch operand']
  %s0 = inlined_call_operand.hbm [shape: bf16[2,4,16,16], index: 0, kind: input, shape index: {}]
  %s1 = inlined_call_operand.hbm [shape: bf16[2,4,32,32], index: 1, kind: input, shape index: {}]
  %s2 = inlined_call_operand.hbm [shape: bf16[2,4,32,32], index: 2, kind: input, shape index: {}]
  %s3 = inlined_call_operand.vmem [shape: bf16[64,16], index: 3, kind: input, shape index: {}]
  %s4 = inlined_call_operand.hbm [shape: bf16[16,32], index: 4, kind: input, shape index: {}]
  %s5 = inlined_call_operand.hbm [shape: bf16[16,32], index: 5, kind: input, shape index: {}]
  %s6 = inlined_call_operand.hbm [shape: bf16[16,32], index: 6, kind: input, shape index: {}]
  %s7 = inlined_call_operand.vmem [shape: bf16[32,32], index: 7, kind: input, shape index: {}]
  %s8 = inlined_call_operand.vmem [shape: bf16[32,128], index: 8, kind: input, shape index: {}]
  %s9 = inlined_call_operand.hbm [shape: bf16[32,128], index: 9, kind: input, shape index: {}]
  %s10 = inlined_call_operand.vmem [shape: f32[32,32], index: 10, kind: input, shape index: {}]
  %s11 = inlined_call_operand.hbm [shape: f32[2,1,16,128], index: 11, kind: output, shape index: {}]
  %s12 = sld [smem:[#allocation0]]
  $region117: #{tpu_custom_call.1} parent=0
    _
  %s14 = ssub.s32 1, %s12
  %s15 = scalar_select 0, %s14, %s12
  $region1: #{tpu_custom_call.1} parent=0
    #allocation5 [shape = 'u8[8192]{0}', space=vmem, size = 0x2000, scoped, tag = 'input window, operand 0']
    #allocation6 [shape = 's32[2]{0}', space=sflag, size = 0x8, scoped, tag = 'scoped memory for tpu_custom_call.1']
    #allocation7 [shape = 's32[2]{0}', space=sflag, size = 0x8, scoped, tag = 'scoped memory for tpu_custom_call.1']
    #allocation8 [shape = 'u8[16384]{0}', space=vmem, size = 0x4000, scoped, tag = 'input window, operand 1']
    #allocation9 [shape = 's32[2]{0}', space=sflag, size = 0x8, scoped, tag = 'scoped memory for tpu_custom_call.1']
    #allocation10 [shape = 'u8[16384]{0}', space=vmem, size = 0x4000, scoped, tag = 'input window, operand 2']
    #allocation11 [shape = 'u8[4096]{0}', space=vmem, size = 0x1000, scoped, tag = 'input window, operand 4, single buffered']
    #allocation12 [shape = 's32[1]{0}', space=sflag, size = 0x4, scoped, tag = 'scoped memory for tpu_custom_call.1']
    #allocation13 [shape = 'u8[4096]{0}', space=vmem, size = 0x1000, scoped, tag = 'input window, operand 5, single buffered']
    #allocation14 [shape = 'u8[4096]{0}', space=vmem, size = 0x1000, scoped, tag = 'input window, operand 6, single buffered']
    #allocation15 [shape = 's32[1]{0}', space=sflag, size = 0x4, scoped, tag = 'scoped memory for tpu_custom_call.1']
    #allocation16 [shape = 'u8[8192]{0}', space=vmem, size = 0x2000, scoped, tag = 'input window, operand 9, single buffered']
    #allocation17 [shape = 'u8[16384]{0}', space=vmem, size = 0x4000, scoped, tag = 'output window, operand 0']
    %16 = vsyncpa [#allocation6], 0
    %s17 = scalar_lea.sflag [#allocation6], 1
    %18 = vsyncpa %s17, 0
    %19 = vsyncpa [#allocation9], 0
    %s20 = scalar_lea.sflag [#allocation9], 1
    %21 = vsyncpa %s20, 0
    %22 = vsyncpa [#allocation12], 0
    %23 = vsyncpa [#allocation15], 0
    %24 = vsyncpa [#allocation7], 0
    %s25 = scalar_lea.sflag [#allocation7], 1
    %26 = vsyncpa %s25, 0
    loop: start=0, step=1, limit=10
    $region2: #{tpu_custom_call.1} parent=1 // loop_pre_header
      _
    $region3: #{tpu_custom_call.1} parent=1 // loop_header
      %s28 = sphi 0, %s32
      %p29 = scmp.ge.s32.totalorder %s28, 10
      %s35 = sphi 0, %s47
      %s36 = sphi 0, %s43
      %s37 = sphi 0, %s35
      %s38 = sphi 0, %s36
      %s39 = sphi 0, %s37
      %s40 = sphi 0, %s38
      %s52 = sphi 0, %s54
      %s55 = sphi 0, %s52
      %s56 = sphi 0, %s55
      %s72 = sphi 0, %s56
      %s80 = sphi 0, %s82
      %s83 = sphi 0, %s80
      %s84 = sphi 0, %s83
      %s100 = sphi 0, %s84
      %s108 = sphi 0, %s110
      %s111 = sphi 0, %s108
      %s112 = sphi 0, %s111
      %s128 = sphi 0, %s112
      %s132 = sphi 0, %s132
      %s134 = sphi 0, %s132
      %s135 = sphi 0, %s134
      %s149 = sphi 0, %s135
      %s153 = sphi 0, %s153
      %s155 = sphi 0, %s153
      %s156 = sphi 0, %s155
      %s170 = sphi 0, %s156
      %s174 = sphi 0, %s174
      %s176 = sphi 0, %s174
      %s177 = sphi 0, %s176
      %s191 = sphi 0, %s177
      %s195 = sphi 0, %s195
      %s197 = sphi 0, %s195
      %s198 = sphi 0, %s197
      %s212 = sphi 0, %s198
      %s216 = sphi 0, %s216
      %s218 = sphi 0, %s216
      %s219 = sphi 0, %s218
      %s233 = sphi 0, %s219
      %s237 = sphi 0, %s237
      %s239 = sphi 0, %s237
      %s240 = sphi 0, %s239
      %s254 = sphi 0, %s240
      %s258 = sphi 0, %s258
      %s260 = sphi 0, %s258
      %s261 = sphi 0, %s260
      %s275 = sphi 0, %s261
      %s279 = sphi 0, %s279
      %s281 = sphi 0, %s279
      %s282 = sphi 0, %s281
      %s296 = sphi 0, %s282
      %s302 = sphi 0, %s304
      %s305 = sphi 0, %s302
      %s306 = sphi 0, %s305
      %s322 = sphi 0, %s306
    $region4: #{tpu_custom_call.1} parent=1 // loop_header_branch
      %31 = sbr.rel (%p29) target = $region8
    $region5: #{tpu_custom_call.1} parent=1 // loop_body
      %s33 = ssub.s32 %s28, 1
      %s34 = ssub.s32 %s28, 2
      %s41 = sadd.s32 1, %s36
      %p42 = scmp.ge.s32.totalorder %s41, 4
      %s43 = scalar_select %p42, 0, %s41
      %s44 = sadd.s32 1, %s35
      %s45 = scalar_select %p42, %s44, %s35
      %p46 = scmp.ge.s32.totalorder %s45, 2
      %s47 = scalar_select %p46, 0, %s45
      %s48 = ssub.s32 %s35, %s47
      %s49 = ssub.s32 %s36, %s43
      %s50 = sor.u32 %s48, %s49
      %p51 = scmp.eq.s32.totalorder %s50, 0
      %s53 = sadd.s32 %s52, 1
      %s54 = scalar_select %p51, %s52, %s53
      %p57 = pneg %p51
      %p58 = scmp.eq.s32.totalorder %s28, 7
      %p59 = por %p57, %p58
      %p60 = scmp.ne.s32.totalorder %s52, %s55
      %p61 = scmp.eq.s32.totalorder %s28, 0
      %p62 = por %p60, %p61
      %p63 = scmp.ne.s32.totalorder %s52, %s55
      %p64 = scmp.eq.s32.totalorder %s33, 7
      %p65 = por %p63, %p64
      %p66 = scmp.ne.s32.totalorder %s55, %s56
      %p67 = scmp.eq.s32.totalorder %s33, 0
      %p68 = por %p66, %p67
      %p69 = scmp.ne.s32.totalorder %s55, %s56
      %p70 = scmp.eq.s32.totalorder %s34, 7
      %p71 = por %p69, %p70
      %p73 = scmp.ne.s32.totalorder %s56, %s72
      %p74 = scmp.eq.s32.totalorder %s34, 0
      %p75 = por %p73, %p74
      %s76 = ssub.s32 %s35, %s47
      %s77 = ssub.s32 %s36, %s43
      %s78 = sor.u32 %s76, %s77
      %p79 = scmp.eq.s32.totalorder %s78, 0
      %s81 = sadd.s32 %s80, 1
      %s82 = scalar_select %p79, %s80, %s81
      %p85 = pneg %p79
      %p86 = scmp.eq.s32.totalorder %s28, 7
      %p87 = por %p85, %p86
      %p88 = scmp.ne.s32.totalorder %s80, %s83
      %p89 = scmp.eq.s32.totalorder %s28, 0
      %p90 = por %p88, %p89
      %p91 = scmp.ne.s32.totalorder %s80, %s83
      %p92 = scmp.eq.s32.totalorder %s33, 7
      %p93 = por %p91, %p92
      %p94 = scmp.ne.s32.totalorder %s83, %s84
      %p95 = scmp.eq.s32.totalorder %s33, 0
      %p96 = por %p94, %p95
      %p97 = scmp.ne.s32.totalorder %s83, %s84
      %p98 = scmp.eq.s32.totalorder %s34, 7
      %p99 = por %p97, %p98
      %p101 = scmp.ne.s32.totalorder %s84, %s100
      %p102 = scmp.eq.s32.totalorder %s34, 0
      %p103 = por %p101, %p102
      %s104 = ssub.s32 %s35, %s47
      %s105 = ssub.s32 %s36, %s43
      %s106 = sor.u32 %s104, %s105
      %p107 = scmp.eq.s32.totalorder %s106, 0
      %s109 = sadd.s32 %s108, 1
      %s110 = scalar_select %p107, %s108, %s109
      %p113 = pneg %p107
      %p114 = scmp.eq.s32.totalorder %s28, 7
      %p115 = por %p113, %p114
      %p116 = scmp.ne.s32.totalorder %s108, %s111
      %p117 = scmp.eq.s32.totalorder %s28, 0
      %p118 = por %p116, %p117
      %p119 = scmp.ne.s32.totalorder %s108, %s111
      %p120 = scmp.eq.s32.totalorder %s33, 7
      %p121 = por %p119, %p120
      %p122 = scmp.ne.s32.totalorder %s111, %s112
      %p123 = scmp.eq.s32.totalorder %s33, 0
      %p124 = por %p122, %p123
      %p125 = scmp.ne.s32.totalorder %s111, %s112
      %p126 = scmp.eq.s32.totalorder %s34, 7
      %p127 = por %p125, %p126
      %p129 = scmp.ne.s32.totalorder %s112, %s128
      %p130 = scmp.eq.s32.totalorder %s34, 0
      %p131 = por %p129, %p130
      %s133 = sadd.s32 %s132, 1
      %p136 = scmp.eq.s32.totalorder %s28, 7
      %p137 = scmp.ne.s32.totalorder %s132, %s134
      %p138 = scmp.eq.s32.totalorder %s28, 0
      %p139 = por %p137, %p138
      %p140 = scmp.ne.s32.totalorder %s132, %s134
      %p141 = scmp.eq.s32.totalorder %s33, 7
      %p142 = por %p140, %p141
      %p143 = scmp.ne.s32.totalorder %s134, %s135
      %p144 = scmp.eq.s32.totalorder %s33, 0
      %p145 = por %p143, %p144
      %p146 = scmp.ne.s32.totalorder %s134, %s135
      %p147 = scmp.eq.s32.totalorder %s34, 7
      %p148 = por %p146, %p147
      %p150 = scmp.ne.s32.totalorder %s135, %s149
      %p151 = scmp.eq.s32.totalorder %s34, 0
      %p152 = por %p150, %p151
      %s154 = sadd.s32 %s153, 1
      %p157 = scmp.eq.s32.totalorder %s28, 7
      %p158 = scmp.ne.s32.totalorder %s153, %s155
      %p159 = scmp.eq.s32.totalorder %s28, 0
      %p160 = por %p158, %p159
      %p161 = scmp.ne.s32.totalorder %s153, %s155
      %p162 = scmp.eq.s32.totalorder %s33, 7
      %p163 = por %p161, %p162
      %p164 = scmp.ne.s32.totalorder %s155, %s156
      %p165 = scmp.eq.s32.totalorder %s33, 0
      %p166 = por %p164, %p165
      %p167 = scmp.ne.s32.totalorder %s155, %s156
      %p168 = scmp.eq.s32.totalorder %s34, 7
      %p169 = por %p167, %p168
      %p171 = scmp.ne.s32.totalorder %s156, %s170
      %p172 = scmp.eq.s32.totalorder %s34, 0
      %p173 = por %p171, %p172
      %s175 = sadd.s32 %s174, 1
      %p178 = scmp.eq.s32.totalorder %s28, 7
      %p179 = scmp.ne.s32.totalorder %s174, %s176
      %p180 = scmp.eq.s32.totalorder %s28, 0
      %p181 = por %p179, %p180
      %p182 = scmp.ne.s32.totalorder %s174, %s176
      %p183 = scmp.eq.s32.totalorder %s33, 7
      %p184 = por %p182, %p183
      %p185 = scmp.ne.s32.totalorder %s176, %s177
      %p186 = scmp.eq.s32.totalorder %s33, 0
      %p187 = por %p185, %p186
      %p188 = scmp.ne.s32.totalorder %s176, %s177
      %p189 = scmp.eq.s32.totalorder %s34, 7
      %p190 = por %p188, %p189
      %p192 = scmp.ne.s32.totalorder %s177, %s191
      %p193 = scmp.eq.s32.totalorder %s34, 0
      %p194 = por %p192, %p193
      %s196 = sadd.s32 %s195, 1
      %p199 = scmp.eq.s32.totalorder %s28, 7
      %p200 = scmp.ne.s32.totalorder %s195, %s197
      %p201 = scmp.eq.s32.totalorder %s28, 0
      %p202 = por %p200, %p201
      %p203 = scmp.ne.s32.totalorder %s195, %s197
      %p204 = scmp.eq.s32.totalorder %s33, 7
      %p205 = por %p203, %p204
      %p206 = scmp.ne.s32.totalorder %s197, %s198
      %p207 = scmp.eq.s32.totalorder %s33, 0
      %p208 = por %p206, %p207
      %p209 = scmp.ne.s32.totalorder %s197, %s198
      %p210 = scmp.eq.s32.totalorder %s34, 7
      %p211 = por %p209, %p210
      %p213 = scmp.ne.s32.totalorder %s198, %s212
      %p214 = scmp.eq.s32.totalorder %s34, 0
      %p215 = por %p213, %p214
      %s217 = sadd.s32 %s216, 1
      %p220 = scmp.eq.s32.totalorder %s28, 7
      %p221 = scmp.ne.s32.totalorder %s216, %s218
      %p222 = scmp.eq.s32.totalorder %s28, 0
      %p223 = por %p221, %p222
      %p224 = scmp.ne.s32.totalorder %s216, %s218
      %p225 = scmp.eq.s32.totalorder %s33, 7
      %p226 = por %p224, %p225
      %p227 = scmp.ne.s32.totalorder %s218, %s219
      %p228 = scmp.eq.s32.totalorder %s33, 0
      %p229 = por %p227, %p228
      %p230 = scmp.ne.s32.totalorder %s218, %s219
      %p231 = scmp.eq.s32.totalorder %s34, 7
      %p232 = por %p230, %p231
      %p234 = scmp.ne.s32.totalorder %s219, %s233
      %p235 = scmp.eq.s32.totalorder %s34, 0
      %p236 = por %p234, %p235
      %s238 = sadd.s32 %s237, 1
      %p241 = scmp.eq.s32.totalorder %s28, 7
      %p242 = scmp.ne.s32.totalorder %s237, %s239
      %p243 = scmp.eq.s32.totalorder %s28, 0
      %p244 = por %p242, %p243
      %p245 = scmp.ne.s32.totalorder %s237, %s239
      %p246 = scmp.eq.s32.totalorder %s33, 7
      %p247 = por %p245, %p246
      %p248 = scmp.ne.s32.totalorder %s239, %s240
      %p249 = scmp.eq.s32.totalorder %s33, 0
      %p250 = por %p248, %p249
      %p251 = scmp.ne.s32.totalorder %s239, %s240
      %p252 = scmp.eq.s32.totalorder %s34, 7
      %p253 = por %p251, %p252
      %p255 = scmp.ne.s32.totalorder %s240, %s254
      %p256 = scmp.eq.s32.totalorder %s34, 0
      %p257 = por %p255, %p256
      %s259 = sadd.s32 %s258, 1
      %p262 = scmp.eq.s32.totalorder %s28, 7
      %p263 = scmp.ne.s32.totalorder %s258, %s260
      %p264 = scmp.eq.s32.totalorder %s28, 0
      %p265 = por %p263, %p264
      %p266 = scmp.ne.s32.totalorder %s258, %s260
      %p267 = scmp.eq.s32.totalorder %s33, 7
      %p268 = por %p266, %p267
      %p269 = scmp.ne.s32.totalorder %s260, %s261
      %p270 = scmp.eq.s32.totalorder %s33, 0
      %p271 = por %p269, %p270
      %p272 = scmp.ne.s32.totalorder %s260, %s261
      %p273 = scmp.eq.s32.totalorder %s34, 7
      %p274 = por %p272, %p273
      %p276 = scmp.ne.s32.totalorder %s261, %s275
      %p277 = scmp.eq.s32.totalorder %s34, 0
      %p278 = por %p276, %p277
      %s280 = sadd.s32 %s279, 1
      %p283 = scmp.eq.s32.totalorder %s28, 7
      %p284 = scmp.ne.s32.totalorder %s279, %s281
      %p285 = scmp.eq.s32.totalorder %s28, 0
      %p286 = por %p284, %p285
      %p287 = scmp.ne.s32.totalorder %s279, %s281
      %p288 = scmp.eq.s32.totalorder %s33, 7
      %p289 = por %p287, %p288
      %p290 = scmp.ne.s32.totalorder %s281, %s282
      %p291 = scmp.eq.s32.totalorder %s33, 0
      %p292 = por %p290, %p291
      %p293 = scmp.ne.s32.totalorder %s281, %s282
      %p294 = scmp.eq.s32.totalorder %s34, 7
      %p295 = por %p293, %p294
      %p297 = scmp.ne.s32.totalorder %s282, %s296
      %p298 = scmp.eq.s32.totalorder %s34, 0
      %p299 = por %p297, %p298
      %s300 = ssub.s32 %s35, %s47
      %p301 = scmp.eq.s32.totalorder %s300, 0
      %s303 = sadd.s32 %s302, 1
      %s304 = scalar_select %p301, %s302, %s303
      %p307 = pneg %p301
      %p308 = scmp.eq.s32.totalorder %s28, 7
      %p309 = por %p307, %p308
      %p310 = scmp.ne.s32.totalorder %s302, %s305
      %p311 = scmp.eq.s32.totalorder %s28, 0
      %p312 = por %p310, %p311
      %p313 = scmp.ne.s32.totalorder %s302, %s305
      %p314 = scmp.eq.s32.totalorder %s33, 7
      %p315 = por %p313, %p314
      %p316 = scmp.ne.s32.totalorder %s305, %s306
      %p317 = scmp.eq.s32.totalorder %s33, 0
      %p318 = por %p316, %p317
      %p319 = scmp.ne.s32.totalorder %s305, %s306
      %p320 = scmp.eq.s32.totalorder %s34, 7
      %p321 = por %p319, %p320
      %p323 = scmp.ne.s32.totalorder %s306, %s322
      %p324 = scmp.eq.s32.totalorder %s34, 0
      %p325 = por %p323, %p324
      %p326 = scmp.le.s32.totalorder 1, %s28
      %p327 = scmp.lt.s32.totalorder %s28, 9
      %p328 = pnand %p326, %p327
      %p329 = pneg %p328
      // Predicated region
      $region9: #{tpu_custom_call.1} parent=5 // pred_check
        _
      $region10: #{tpu_custom_call.1} parent=5 // pred_check_branch
        %331 = sbr.rel (%p328) target = $region12
      $region11: #{tpu_custom_call.1} parent=5 // pred_region
        %s332 = ssub.s32 %s28, 1
        // Predicated region
        $region13: #{tpu_custom_call.1} parent=11 // pred_check
          %p333 = pneg %p145
        $region14: #{tpu_custom_call.1} parent=11 // pred_check_branch
          %335 = sbr.rel (%p333) target = $region16
        $region15: #{tpu_custom_call.1} parent=11 // pred_region
          _
        $region16: #{tpu_custom_call.1} parent=11 // pred_fallthru
          _
        // Predicated region
        $region17: #{tpu_custom_call.1} parent=11 // pred_check
          %p336 = pneg %p166
        $region18: #{tpu_custom_call.1} parent=11 // pred_check_branch
          %338 = sbr.rel (%p336) target = $region20
        $region19: #{tpu_custom_call.1} parent=11 // pred_region
          %s340 = ssub.s32 128, 128
          %341 = vsyncadd [#allocation12], %s340
          %s342 = sshll.u32 [#allocation11], 4
          %s343 = int_to_ptr.vmem [resolvable:$true] %s342
          %348 = dma.hbm_to_vmem [thread:$0]  %s4, 128, %s343, [#allocation12], 64, 64, 4
        $region20: #{tpu_custom_call.1} parent=11 // pred_fallthru
          _
        // Predicated region
        $region21: #{tpu_custom_call.1} parent=11 // pred_check
          %p349 = pneg %p187
        $region22: #{tpu_custom_call.1} parent=11 // pred_check_branch
          %351 = sbr.rel (%p349) target = $region24
        $region23: #{tpu_custom_call.1} parent=11 // pred_region
          %s353 = ssub.s32 128, 128
          %354 = vsyncadd [#allocation12], %s353
          %s355 = sshll.u32 [#allocation13], 4
          %s356 = int_to_ptr.vmem [resolvable:$true] %s355
          %361 = dma.hbm_to_vmem [thread:$0]  %s5, 128, %s356, [#allocation12], 64, 64, 4
        $region24: #{tpu_custom_call.1} parent=11 // pred_fallthru
          _
        // Predicated region
        $region25: #{tpu_custom_call.1} parent=11 // pred_check
          %p362 = pneg %p208
        $region26: #{tpu_custom_call.1} parent=11 // pred_check_branch
          %364 = sbr.rel (%p362) target = $region28
        $region27: #{tpu_custom_call.1} parent=11 // pred_region
          %s366 = ssub.s32 128, 128
          %367 = vsyncadd [#allocation15], %s366
          %s368 = sshll.u32 [#allocation14], 4
          %s369 = int_to_ptr.vmem [resolvable:$true] %s368
          %374 = dma.hbm_to_vmem [thread:$0]  %s6, 128, %s369, [#allocation15], 64, 64, 4
        $region28: #{tpu_custom_call.1} parent=11 // pred_fallthru
          _
        // Predicated region
        $region29: #{tpu_custom_call.1} parent=11 // pred_check
          %p375 = pneg %p229
        $region30: #{tpu_custom_call.1} parent=11 // pred_check_branch
          %377 = sbr.rel (%p375) target = $region32
        $region31: #{tpu_custom_call.1} parent=11 // pred_region
          _
        $region32: #{tpu_custom_call.1} parent=11 // pred_fallthru
          _
        // Predicated region
        $region33: #{tpu_custom_call.1} parent=11 // pred_check
          %p378 = pneg %p250
        $region34: #{tpu_custom_call.1} parent=11 // pred_check_branch
          %380 = sbr.rel (%p378) target = $region36
        $region35: #{tpu_custom_call.1} parent=11 // pred_region
          _
        $region36: #{tpu_custom_call.1} parent=11 // pred_fallthru
          _
        // Predicated region
        $region37: #{tpu_custom_call.1} parent=11 // pred_check
          %p381 = pneg %p271
        $region38: #{tpu_custom_call.1} parent=11 // pred_check_branch
          %383 = sbr.rel (%p381) target = $region40
        $region39: #{tpu_custom_call.1} parent=11 // pred_region
          %s385 = ssub.s32 256, 256
          %386 = vsyncadd [#allocation15], %s385
          %s387 = sshll.u32 [#allocation16], 4
          %s388 = int_to_ptr.vmem [resolvable:$true] %s387
          %393 = dma.hbm_to_vmem [thread:$0]  %s9, 256, %s388, [#allocation15], 64, 64, 4
        $region40: #{tpu_custom_call.1} parent=11 // pred_fallthru
          _
        // Predicated region
        $region41: #{tpu_custom_call.1} parent=11 // pred_check
          %p394 = pneg %p292
        $region42: #{tpu_custom_call.1} parent=11 // pred_check_branch
          %396 = sbr.rel (%p394) target = $region44
        $region43: #{tpu_custom_call.1} parent=11 // pred_region
          _
        $region44: #{tpu_custom_call.1} parent=11 // pred_fallthru
          _
      $region12: #{tpu_custom_call.1} parent=5 // pred_fallthru
        _
      %p397 = scmp.lt.s32.totalorder %s28, 8
      // Predicated region
      $region45: #{tpu_custom_call.1} parent=5 // pred_check
        %p398 = pneg %p397
      $region46: #{tpu_custom_call.1} parent=5 // pred_check_branch
        %400 = sbr.rel (%p398) target = $region48
      $region47: #{tpu_custom_call.1} parent=5 // pred_region
        // Predicated region
        $region49: #{tpu_custom_call.1} parent=47 // pred_check
          %p401 = pneg %p62
        $region50: #{tpu_custom_call.1} parent=47 // pred_check_branch
          %403 = sbr.rel (%p401) target = $region52
        $region51: #{tpu_custom_call.1} parent=47 // pred_region
          %s404 = sand.u32 %s52, 1
          %s405 = scalar_lea.sflag [#allocation6], %s404
          %s406 = sand.u32 %s52, 1
          %s407 = smul.addr %s406, 8
          %s408 = scalar_lea.vmem [#allocation5], %s407
          %s410 = ssub.s32 128, 128
          %411 = vsyncadd %s405, %s410
          %s412 = smul.addr %s36, 2
          %s413 = smul.addr %s35, 8
          %s414 = sadd.s32 %s412, %s413
          %s415 = smul.addr %s414, 64
          %s416 = scalar_lea.hbm %s0, %s415
          %s417 = sshll.u32 %s408, 4
          %s418 = int_to_ptr.vmem [resolvable:$true] %s417
          %423 = dma.hbm_to_vmem [thread:$0]  %s416, 128, %s418, %s405, 64, 64, 4
        $region52: #{tpu_custom_call.1} parent=47 // pred_fallthru
          _
        // Predicated region
        $region53: #{tpu_custom_call.1} parent=47 // pred_check
          %p424 = pneg %p90
        $region54: #{tpu_custom_call.1} parent=47 // pred_check_branch
          %426 = sbr.rel (%p424) target = $region56
        $region55: #{tpu_custom_call.1} parent=47 // pred_region
          %s427 = sand.u32 %s28, 1
          %s428 = scalar_lea.sflag [#allocation9], %s427
          %s429 = sand.u32 %s80, 1
          %s430 = smul.addr %s429, 16
          %s431 = scalar_lea.vmem [#allocation8], %s430
          %s433 = ssub.s32 256, 256
          %434 = vsyncadd %s428, %s433
          %s435 = smul.addr %s36, 4
          %s436 = smul.addr %s35, 16
          %s437 = sadd.s32 %s435, %s436
          %s438 = smul.addr %s437, 64
          %s439 = scalar_lea.hbm %s1, %s438
          %s440 = sshll.u32 %s431, 4
          %s441 = int_to_ptr.vmem [resolvable:$true] %s440
          %446 = dma.hbm_to_vmem [thread:$0]  %s439, 256, %s441, %s428, 64, 64, 4
        $region56: #{tpu_custom_call.1} parent=47 // pred_fallthru
          _
        // Predicated region
        $region57: #{tpu_custom_call.1} parent=47 // pred_check
          %p447 = pneg %p118
        $region58: #{tpu_custom_call.1} parent=47 // pred_check_branch
          %449 = sbr.rel (%p447) target = $region60
        $region59: #{tpu_custom_call.1} parent=47 // pred_region
          %s450 = sand.u32 %s28, 1
          %s451 = scalar_lea.sflag [#allocation9], %s450
          %s452 = sand.u32 %s108, 1
          %s453 = smul.addr %s452, 16
          %s454 = scalar_lea.vmem [#allocation10], %s453
          %s456 = ssub.s32 256, 256
          %457 = vsyncadd %s451, %s456
          %s458 = smul.addr %s36, 4
          %s459 = smul.addr %s35, 16
          %s460 = sadd.s32 %s458, %s459
          %s461 = smul.addr %s460, 64
          %s462 = scalar_lea.hbm %s2, %s461
          %s463 = sshll.u32 %s454, 4
          %s464 = int_to_ptr.vmem [resolvable:$true] %s463
          %469 = dma.hbm_to_vmem [thread:$0]  %s462, 256, %s464, %s451, 64, 64, 4
        $region60: #{tpu_custom_call.1} parent=47 // pred_fallthru
          _
      $region48: #{tpu_custom_call.1} parent=5 // pred_fallthru
        _
      %p470 = scmp.le.s32.totalorder 1, %s28
      %p471 = scmp.lt.s32.totalorder %s28, 9
      %p472 = pnand %p470, %p471
      %p473 = pneg %p472
      // Predicated region
      $region61: #{tpu_custom_call.1} parent=5 // pred_check
        _
      $region62: #{tpu_custom_call.1} parent=5 // pred_check_branch
        %475 = sbr.rel (%p472) target = $region64
      $region63: #{tpu_custom_call.1} parent=5 // pred_region
        %s476 = ssub.s32 %s28, 1
        %s477 = sand.u32 %s55, 1
        %s478 = scalar_lea.sflag [#allocation6], %s477
        %s479 = sand.u32 %s55, 1
        %s480 = smul.addr %s479, 8
        %s481 = scalar_lea.vmem [#allocation5], %s480
        // Predicated region
        $region65: #{tpu_custom_call.1} parent=63 // pred_check
          %p482 = pneg %p68
        $region66: #{tpu_custom_call.1} parent=63 // pred_check_branch
          %484 = sbr.rel (%p482) target = $region68
        $region67: #{tpu_custom_call.1} parent=63 // pred_region
          %485 = dma.done %s478, 128
        $region68: #{tpu_custom_call.1} parent=63 // pred_fallthru
          _
        %s486 = sand.u32 %s33, 1
        %s487 = scalar_lea.sflag [#allocation9], %s486
        %s488 = sand.u32 %s83, 1
        %s489 = smul.addr %s488, 16
        %s490 = scalar_lea.vmem [#allocation8], %s489
        // Predicated region
        $region69: #{tpu_custom_call.1} parent=63 // pred_check
          %p491 = pneg %p96
        $region70: #{tpu_custom_call.1} parent=63 // pred_check_branch
          %493 = sbr.rel (%p491) target = $region72
        $region71: #{tpu_custom_call.1} parent=63 // pred_region
          %494 = dma.done %s487, 256
        $region72: #{tpu_custom_call.1} parent=63 // pred_fallthru
          _
        %s495 = sand.u32 %s33, 1
        %s496 = scalar_lea.sflag [#allocation9], %s495
        %s497 = sand.u32 %s111, 1
        %s498 = smul.addr %s497, 16
        %s499 = scalar_lea.vmem [#allocation10], %s498
        // Predicated region
        $region73: #{tpu_custom_call.1} parent=63 // pred_check
          %p500 = pneg %p124
        $region74: #{tpu_custom_call.1} parent=63 // pred_check_branch
          %502 = sbr.rel (%p500) target = $region76
        $region75: #{tpu_custom_call.1} parent=63 // pred_region
          %503 = dma.done %s496, 256
        $region76: #{tpu_custom_call.1} parent=63 // pred_fallthru
          _
        // Predicated region
        $region77: #{tpu_custom_call.1} parent=63 // pred_check
          %p504 = pneg %p166
        $region78: #{tpu_custom_call.1} parent=63 // pred_check_branch
          %506 = sbr.rel (%p504) target = $region80
        $region79: #{tpu_custom_call.1} parent=63 // pred_region
          %507 = dma.done [#allocation12], 128
        $region80: #{tpu_custom_call.1} parent=63 // pred_fallthru
          _
        // Predicated region
        $region81: #{tpu_custom_call.1} parent=63 // pred_check
          %p508 = pneg %p187
        $region82: #{tpu_custom_call.1} parent=63 // pred_check_branch
          %510 = sbr.rel (%p508) target = $region84
        $region83: #{tpu_custom_call.1} parent=63 // pred_region
          %511 = dma.done [#allocation12], 128
        $region84: #{tpu_custom_call.1} parent=63 // pred_fallthru
          _
        // Predicated region
        $region85: #{tpu_custom_call.1} parent=63 // pred_check
          %p512 = pneg %p208
        $region86: #{tpu_custom_call.1} parent=63 // pred_check_branch
          %514 = sbr.rel (%p512) target = $region88
        $region87: #{tpu_custom_call.1} parent=63 // pred_region
          %515 = dma.done [#allocation15], 128
        $region88: #{tpu_custom_call.1} parent=63 // pred_fallthru
          _
        // Predicated region
        $region89: #{tpu_custom_call.1} parent=63 // pred_check
          %p516 = pneg %p271
        $region90: #{tpu_custom_call.1} parent=63 // pred_check_branch
          %518 = sbr.rel (%p516) target = $region92
        $region91: #{tpu_custom_call.1} parent=63 // pred_region
          %519 = dma.done [#allocation15], 256
        $region92: #{tpu_custom_call.1} parent=63 // pred_fallthru
          _
        %s520 = sand.u32 %s55, 1
        %s521 = scalar_lea.sflag [#allocation6], %s520
        %s522 = sand.u32 %s55, 1
        %s523 = smul.addr %s522, 8
        %s524 = scalar_lea.vmem [#allocation5], %s523
        %p525 = pneg %p68
        %p526 = pneg %p65
        %s527 = sand.u32 %s33, 1
        %s528 = scalar_lea.sflag [#allocation9], %s527
        %s529 = sand.u32 %s83, 1
        %s530 = smul.addr %s529, 16
        %s531 = scalar_lea.vmem [#allocation8], %s530
        %p532 = pneg %p96
        %p533 = pneg %p93
        %s534 = sand.u32 %s33, 1
        %s535 = scalar_lea.sflag [#allocation9], %s534
        %s536 = sand.u32 %s111, 1
        %s537 = smul.addr %s536, 16
        %s538 = scalar_lea.vmem [#allocation10], %s537
        %p539 = pneg %p124
        %p540 = pneg %p121
        %p541 = pneg %p145
        %p542 = pneg %p142
        %p543 = pneg %p166
        %p544 = pneg %p163
        %p545 = pneg %p187
        %p546 = pneg %p184
        %p547 = pneg %p208
        %p548 = pneg %p205
        %p549 = pneg %p229
        %p550 = pneg %p226
        %p551 = pneg %p250
        %p552 = pneg %p247
        %p553 = pneg %p271
        %p554 = pneg %p268
        %p555 = pneg %p292
        %p556 = pneg %p289
        %p557 = pneg %p318
        %p558 = pneg %p315
        %s559 = sand.u32 %s305, 1
        %s560 = scalar_lea.sflag [#allocation7], %s559
        %s561 = sand.u32 %s305, 1
        %s562 = smul.addr %s561, 16
        %s563 = scalar_lea.vmem [#allocation17], %s562
        %v565 = vld [vmem:[%s481] sm:$0xf]
        %v566 = vld [vmem:[%s481 + $0x4] sm:$0xf]
        %v567 = vld [vmem:[%s3] sm:$0xf]
        %v568 = vld [vmem:[%s3 + $0x4] sm:$0xf]
        %v569 = vld [vmem:[%s3 + $0x8] sm:$0xf]
        %v570 = vld [vmem:[%s3 + $0xc] sm:$0xf]
        %v571 = vld [vmem:[%s3 + $0x10] sm:$0xf]
        %v572 = vld [vmem:[%s3 + $0x14] sm:$0xf]
        %v573 = vld [vmem:[%s3 + $0x18] sm:$0xf]
        %v574 = vld [vmem:[%s3 + $0x1c] sm:$0xf]
        %v583 = vunpack.c.l.b16 %v567
        %v584 = vunpack.c.l.b16 %v568
        %v585 = vunpack.c.l.b16 %v569
        %v586 = vunpack.c.l.b16 %v570
        %v587 = vunpack.c.l.b16 %v571
        %v588 = vunpack.c.l.b16 %v572
        %v589 = vunpack.c.l.b16 %v573
        %v590 = vunpack.c.l.b16 %v574
        %v591 = vpack.c.b16 %v584, %v583
        %v592 = vpack.c.b16 %v586, %v585
        %v593 = vpack.c.b16 %v588, %v587
        %v594 = vpack.c.b16 %v590, %v589
        %v597 = vunpack.c.l.b16 %v565
        %v598 = vunpack.c.l.b16 %v566
        %v599 = vpack.c.b16 %v598, %v597
        %vm601 = vcmask 130048
        %v603 = vsel %vm601, %v591, 0
        %v606 = vsel %vm601, %v592, 0
        %v609 = vsel %vm601, %v593, 0
        %v612 = vsel %vm601, %v594, 0
        %614 = vmatprep.subr.bf16.mxu0 0
        %615 = vmatpush1.bf16.msra.mxu0 %v599
        %616 = vmatprep.subr.bf16.mxu0 0
        %617 = vmatpush1.bf16.msra.mxu0 0
        %618 = vmatprep.subr.bf16.mxu0 0
        %619 = vmatpush1.bf16.msra.mxu0 0
        %620 = vmatprep.subr.bf16.mxu0 0
        %621 = vmatpush1.bf16.msra.mxu0 0
        %622 = vmatprep.subr.bf16.mxu0 0
        %623 = vmatpush1.bf16.msra.mxu0 0
        %624 = vmatprep.subr.bf16.mxu0 0
        %625 = vmatpush1.bf16.msra.mxu0 0
        %626 = vmatprep.subr.bf16.mxu0 0
        %627 = vmatpush1.bf16.msra.mxu0 0
        %628 = vmatprep.subr.bf16.mxu0 0
        %629 = vmatpush1.bf16.msra.mxu0 0
        %630 = vmatprep.subr.bf16.mxu0 0
        %631 = vmatpush1.bf16.msra.mxu0 0
        %632 = vmatprep.subr.bf16.mxu0 0
        %633 = vmatpush1.bf16.msra.mxu0 0
        %634 = vmatprep.subr.bf16.mxu0 0
        %635 = vmatpush1.bf16.msra.mxu0 0
        %636 = vmatprep.subr.bf16.mxu0 0
        %637 = vmatpush1.bf16.msra.mxu0 0
        %638 = vmatprep.subr.bf16.mxu0 0
        %639 = vmatpush1.bf16.msra.mxu0 0
        %640 = vmatprep.subr.bf16.mxu0 0
        %641 = vmatpush1.bf16.msra.mxu0 0
        %642 = vmatprep.subr.bf16.mxu0 0
        %643 = vmatpush1.bf16.msra.mxu0 0
        %644 = vmatprep.subr.bf16.mxu0 0
        %645 = vmatpush1.bf16.msra.mxu0 0
        %646 = vmatprep.mubr.bf16.mxu0 0
        %647 = vmatmul.mubr.bf16.gmra.mrb[0].mxu0 %v603
        %v648 = vpop.f32.mrb[0].mxu0
        %v649 = vadd.f32 0.0, %v648
        %v650 = vpop.f32.mrb[0].mxu0
        %v651 = vpop.f32.mrb[0].mxu0
        %v652 = vadd.f32 0.0, %v651
        %v653 = vpop.f32.mrb[0].mxu0
        %654 = vmatprep.mubr.bf16.mxu0 0
        %655 = vmatmul.mubr.bf16.gmra.mrb[0].mxu0 %v606
        %v656 = vpop.f32.mrb[0].mxu0
        %v657 = vadd.f32 0.0, %v656
        %v658 = vpop.f32.mrb[0].mxu0
        %v659 = vpop.f32.mrb[0].mxu0
        %v660 = vadd.f32 0.0, %v659
        %v661 = vpop.f32.mrb[0].mxu0
        %662 = vmatprep.mubr.bf16.mxu0 0
        %663 = vmatmul.mubr.bf16.gmra.mrb[0].mxu0 %v609
        %v664 = vpop.f32.mrb[0].mxu0
        %v665 = vadd.f32 0.0, %v664
        %v666 = vpop.f32.mrb[0].mxu0
        %v667 = vpop.f32.mrb[0].mxu0
        %v668 = vadd.f32 0.0, %v667
        %v669 = vpop.f32.mrb[0].mxu0
        %670 = vmatprep.mubr.bf16.mxu0 0
        %671 = vmatmul.mubr.bf16.gmra.mrb[0].mxu0 %v612
        %v672 = vpop.f32.mrb[0].mxu0
        %v673 = vadd.f32 0.0, %v672
        %v674 = vpop.f32.mrb[0].mxu0
        %v675 = vpop.f32.mrb[0].mxu0
        %v676 = vadd.f32 0.0, %v675
        %v677 = vpop.f32.mrb[0].mxu0
        %678 = vdwg.mxu0
        %v679 = vpack.c.bf16 %v652, %v649
        %v680 = vpack.c.bf16 %v660, %v657
        %v681 = vpack.c.bf16 %v668, %v665
        %v682 = vpack.c.bf16 %v676, %v673
        %v683 = vadd.f32 %v649, %v665
        %v684 = vadd.f32 %v652, %v668
        %v685 = vadd.f32 %v657, %v673
        %v686 = vadd.f32 %v660, %v676
        %v687 = vpack.c.bf16 %v684, %v683
        %v688 = vpack.c.bf16 %v686, %v685
        %v689 = vld [vmem:[#allocation11] sm:$0xf]
        %v690 = vld [vmem:[#allocation11 + $0x4] sm:$0xf]
        %v693 = vunpack.c.l.b16 %v689
        %v694 = vunpack.c.l.b16 %v690
        %v695 = vpack.c.b16 %v694, %v693
        %v698 = vsel %vm601, %v679, 0
        %v701 = vsel %vm601, %v680, 0
        %703 = vmatprep.subr.bf16.mxu0 0
        %704 = vmatpush1.bf16.msra.mxu0 %v695
        %705 = vmatprep.subr.bf16.mxu0 0
        %706 = vmatpush1.bf16.msra.mxu0 0
        %707 = vmatprep.subr.bf16.mxu0 0
        %708 = vmatpush1.bf16.msra.mxu0 0
        %709 = vmatprep.subr.bf16.mxu0 0
        %710 = vmatpush1.bf16.msra.mxu0 0
        %711 = vmatprep.subr.bf16.mxu0 0
        %712 = vmatpush1.bf16.msra.mxu0 0
        %713 = vmatprep.subr.bf16.mxu0 0
        %714 = vmatpush1.bf16.msra.mxu0 0
        %715 = vmatprep.subr.bf16.mxu0 0
        %716 = vmatpush1.bf16.msra.mxu0 0
        %717 = vmatprep.subr.bf16.mxu0 0
        %718 = vmatpush1.bf16.msra.mxu0 0
        %719 = vmatprep.subr.bf16.mxu0 0
        %720 = vmatpush1.bf16.msra.mxu0 0
        %721 = vmatprep.subr.bf16.mxu0 0
        %722 = vmatpush1.bf16.msra.mxu0 0
        %723 = vmatprep.subr.bf16.mxu0 0
        %724 = vmatpush1.bf16.msra.mxu0 0
        %725 = vmatprep.subr.bf16.mxu0 0
        %726 = vmatpush1.bf16.msra.mxu0 0
        %727 = vmatprep.subr.bf16.mxu0 0
        %728 = vmatpush1.bf16.msra.mxu0 0
        %729 = vmatprep.subr.bf16.mxu0 0
        %730 = vmatpush1.bf16.msra.mxu0 0
        %731 = vmatprep.subr.bf16.mxu0 0
        %732 = vmatpush1.bf16.msra.mxu0 0
        %733 = vmatprep.subr.bf16.mxu0 0
        %734 = vmatpush1.bf16.msra.mxu0 0
        %735 = vmatprep.mubr.bf16.mxu0 0
        %736 = vmatmul.mubr.bf16.gmra.mrb[0].mxu0 %v698
        %v737 = vpop.f32.mrb[0].mxu0
        %v738 = vadd.f32 0.0, %v737
        %v739 = vpop.f32.mrb[0].mxu0
        %v740 = vpop.f32.mrb[0].mxu0
        %v741 = vadd.f32 0.0, %v740
        %v742 = vpop.f32.mrb[0].mxu0
        %743 = vmatprep.mubr.bf16.mxu0 0
        %744 = vmatmul.mubr.bf16.gmra.mrb[0].mxu0 %v701
        %v745 = vpop.f32.mrb[0].mxu0
        %v746 = vadd.f32 0.0, %v745
        %v747 = vpop.f32.mrb[0].mxu0
        %v748 = vpop.f32.mrb[0].mxu0
        %v749 = vadd.f32 0.0, %v748
        %v750 = vpop.f32.mrb[0].mxu0
        %751 = vdwg.mxu0
        %v752 = vld [vmem:[#allocation13] sm:$0xf]
        %v753 = vld [vmem:[#allocation13 + $0x4] sm:$0xf]
        %v756 = vunpack.c.l.b16 %v752
        %v757 = vunpack.c.l.b16 %v753
        %v758 = vpack.c.b16 %v757, %v756
        %v761 = vsel %vm601, %v681, 0
        %v764 = vsel %vm601, %v682, 0
        %766 = vmatprep.subr.bf16.mxu0 0
        %767 = vmatpush1.bf16.msra.mxu0 %v758
        %768 = vmatprep.subr.bf16.mxu0 0
        %769 = vmatpush1.bf16.msra.mxu0 0
        %770 = vmatprep.subr.bf16.mxu0 0
        %771 = vmatpush1.bf16.msra.mxu0 0
        %772 = vmatprep.subr.bf16.mxu0 0
        %773 = vmatpush1.bf16.msra.mxu0 0
        %774 = vmatprep.subr.bf16.mxu0 0
        %775 = vmatpush1.bf16.msra.mxu0 0
        %776 = vmatprep.subr.bf16.mxu0 0
        %777 = vmatpush1.bf16.msra.mxu0 0
        %778 = vmatprep.subr.bf16.mxu0 0
        %779 = vmatpush1.bf16.msra.mxu0 0
        %780 = vmatprep.subr.bf16.mxu0 0
        %781 = vmatpush1.bf16.msra.mxu0 0
        %782 = vmatprep.subr.bf16.mxu0 0
        %783 = vmatpush1.bf16.msra.mxu0 0
        %784 = vmatprep.subr.bf16.mxu0 0
        %785 = vmatpush1.bf16.msra.mxu0 0
        %786 = vmatprep.subr.bf16.mxu0 0
        %787 = vmatpush1.bf16.msra.mxu0 0
        %788 = vmatprep.subr.bf16.mxu0 0
        %789 = vmatpush1.bf16.msra.mxu0 0
        %790 = vmatprep.subr.bf16.mxu0 0
        %791 = vmatpush1.bf16.msra.mxu0 0
        %792 = vmatprep.subr.bf16.mxu0 0
        %793 = vmatpush1.bf16.msra.mxu0 0
        %794 = vmatprep.subr.bf16.mxu0 0
        %795 = vmatpush1.bf16.msra.mxu0 0
        %796 = vmatprep.subr.bf16.mxu0 0
        %797 = vmatpush1.bf16.msra.mxu0 0
        %798 = vmatprep.mubr.bf16.mxu0 0
        %799 = vmatmul.mubr.bf16.gmra.mrb[0].mxu0 %v761
        %v800 = vpop.f32.mrb[0].mxu0
        %v801 = vadd.f32 0.0, %v800
        %v802 = vpop.f32.mrb[0].mxu0
        %v803 = vpop.f32.mrb[0].mxu0
        %v804 = vadd.f32 0.0, %v803
        %v805 = vpop.f32.mrb[0].mxu0
        %806 = vmatprep.mubr.bf16.mxu0 0
        %807 = vmatmul.mubr.bf16.gmra.mrb[0].mxu0 %v764
        %v808 = vpop.f32.mrb[0].mxu0
        %v809 = vadd.f32 0.0, %v808
        %v810 = vpop.f32.mrb[0].mxu0
        %v811 = vpop.f32.mrb[0].mxu0
        %v812 = vadd.f32 0.0, %v811
        %v813 = vpop.f32.mrb[0].mxu0
        %814 = vdwg.mxu0
        %v815 = vld [vmem:[#allocation14] sm:$0xf]
        %v816 = vld [vmem:[#allocation14 + $0x4] sm:$0xf]
        %v819 = vunpack.c.l.b16 %v815
        %v820 = vunpack.c.l.b16 %v816
        %v821 = vpack.c.b16 %v820, %v819
        %v824 = vsel %vm601, %v687, 0
        %v827 = vsel %vm601, %v688, 0
        %829 = vmatprep.subr.bf16.mxu0 0
        %830 = vmatpush1.bf16.msra.mxu0 %v821
        %831 = vmatprep.subr.bf16.mxu0 0
        %832 = vmatpush1.bf16.msra.mxu0 0
        %833 = vmatprep.subr.bf16.mxu0 0
        %834 = vmatpush1.bf16.msra.mxu0 0
        %835 = vmatprep.subr.bf16.mxu0 0
        %836 = vmatpush1.bf16.msra.mxu0 0
        %837 = vmatprep.subr.bf16.mxu0 0
        %838 = vmatpush1.bf16.msra.mxu0 0
        %839 = vmatprep.subr.bf16.mxu0 0
        %840 = vmatpush1.bf16.msra.mxu0 0
        %841 = vmatprep.subr.bf16.mxu0 0
        %842 = vmatpush1.bf16.msra.mxu0 0
        %843 = vmatprep.subr.bf16.mxu0 0
        %844 = vmatpush1.bf16.msra.mxu0 0
        %845 = vmatprep.subr.bf16.mxu0 0
        %846 = vmatpush1.bf16.msra.mxu0 0
        %847 = vmatprep.subr.bf16.mxu0 0
        %848 = vmatpush1.bf16.msra.mxu0 0
        %849 = vmatprep.subr.bf16.mxu0 0
        %850 = vmatpush1.bf16.msra.mxu0 0
        %851 = vmatprep.subr.bf16.mxu0 0
        %852 = vmatpush1.bf16.msra.mxu0 0
        %853 = vmatprep.subr.bf16.mxu0 0
        %854 = vmatpush1.bf16.msra.mxu0 0
        %855 = vmatprep.subr.bf16.mxu0 0
        %856 = vmatpush1.bf16.msra.mxu0 0
        %857 = vmatprep.subr.bf16.mxu0 0
        %858 = vmatpush1.bf16.msra.mxu0 0
        %859 = vmatprep.subr.bf16.mxu0 0
        %860 = vmatpush1.bf16.msra.mxu0 0
        %861 = vmatprep.mubr.bf16.mxu0 0
        %862 = vmatmul.mubr.bf16.gmra.mrb[0].mxu0 %v824
        %v863 = vpop.f32.mrb[0].mxu0
        %v864 = vadd.f32 0.0, %v863
        %v865 = vpop.f32.mrb[0].mxu0
        %v866 = vpop.f32.mrb[0].mxu0
        %v867 = vadd.f32 0.0, %v866
        %v868 = vpop.f32.mrb[0].mxu0
        %869 = vmatprep.mubr.bf16.mxu0 0
        %870 = vmatmul.mubr.bf16.gmra.mrb[0].mxu0 %v827
        %v871 = vpop.f32.mrb[0].mxu0
        %v872 = vadd.f32 0.0, %v871
        %v873 = vpop.f32.mrb[0].mxu0
        %v874 = vpop.f32.mrb[0].mxu0
        %v875 = vadd.f32 0.0, %v874
        %v876 = vpop.f32.mrb[0].mxu0
        %877 = vdwg.mxu0
        %v878 = vsub.f32 %v738, %v801
        %v879 = vsub.f32 %v741, %v804
        %v880 = vsub.f32 %v746, %v809
        %v881 = vsub.f32 %v749, %v812
        %v882 = vsub.f32 %v864, %v738
        %v883 = vsub.f32 %v867, %v741
        %v884 = vsub.f32 %v872, %v746
        %v885 = vsub.f32 %v875, %v749
        %v886 = vsub.f32 %v882, %v801
        %v887 = vsub.f32 %v883, %v804
        %v888 = vsub.f32 %v884, %v809
        %v889 = vsub.f32 %v885, %v812
        %v890 = vld [vmem:[%s490] sm:$0xf]
        %v891 = vld [vmem:[%s490 + $0x4] sm:$0xf]
        %v892 = vld [vmem:[%s490 + $0x8] sm:$0xf]
        %v893 = vld [vmem:[%s490 + $0xc] sm:$0xf]
        %v894 = vunpack.c.l.bf16 %v890
        %v895 = vunpack.c.l.bf16 %v891
        %v896 = vunpack.c.l.bf16 %v892
        %v897 = vunpack.c.l.bf16 %v893
        %v898 = vld [vmem:[%s499] sm:$0xf]
        %v899 = vld [vmem:[%s499 + $0x4] sm:$0xf]
        %v900 = vld [vmem:[%s499 + $0x8] sm:$0xf]
        %v901 = vld [vmem:[%s499 + $0xc] sm:$0xf]
        %v902 = vunpack.c.l.bf16 %v898
        %v903 = vunpack.c.l.bf16 %v899
        %v904 = vunpack.c.l.bf16 %v900
        %v905 = vunpack.c.l.bf16 %v901
        %v906 = vmul.f32 %v894, %v878
        %v907 = vmul.f32 %v895, %v879
        %v908 = vmul.f32 %v896, %v880
        %v909 = vmul.f32 %v897, %v881
        %v910 = vmul.f32 %v902, %v886
        %v911 = vmul.f32 %v903, %v887
        %v912 = vmul.f32 %v904, %v888
        %v913 = vmul.f32 %v905, %v889
        %v914 = vadd.f32 %v906, %v910
        %v915 = vadd.f32 %v907, %v911
        %v916 = vadd.f32 %v908, %v912
        %v917 = vadd.f32 %v909, %v913
        %v918 = vmul.f32 %v894, %v886
        %v919 = vmul.f32 %v895, %v887
        %v920 = vmul.f32 %v896, %v888
        %v921 = vmul.f32 %v897, %v889
        %v922 = vmul.f32 %v902, %v878
        %v923 = vmul.f32 %v903, %v879
        %v924 = vmul.f32 %v904, %v880
        %v925 = vmul.f32 %v905, %v881
        %v926 = vsub.f32 %v918, %v922
        %v927 = vsub.f32 %v919, %v923
        %v928 = vsub.f32 %v920, %v924
        %v929 = vsub.f32 %v921, %v925
        %v930 = vmul.f32 %v894, %v894
        %v931 = vmul.f32 %v895, %v895
        %v932 = vmul.f32 %v896, %v896
        %v933 = vmul.f32 %v897, %v897
        %v934 = vmul.f32 %v902, %v902
        %v935 = vmul.f32 %v903, %v903
        %v936 = vmul.f32 %v904, %v904
        %v937 = vmul.f32 %v905, %v905
        %v938 = vadd.f32 %v930, %v934
        %v939 = vadd.f32 %v931, %v935
        %v940 = vadd.f32 %v932, %v936
        %v941 = vadd.f32 %v933, %v937
        %p942 = scmp.eq.s32.totalorder %s38, 0
        // Predicated region
        $region93: #{tpu_custom_call.1} parent=63 // pred_check
          %p943 = pneg %p942
        $region94: #{tpu_custom_call.1} parent=63 // pred_check_branch
          %945 = sbr.rel (%p943) target = $region96
        $region95: #{tpu_custom_call.1} parent=63 // pred_region
          %vm946 = vcmask 261120
          %947 = vst.msk [vmem:[#allocation3] sm:$0xff] %vm946, %v914
          %948 = vst.msk [vmem:[#allocation3 + $0x8] sm:$0xff] %vm946, %v915
          %949 = vst.msk [vmem:[#allocation3 + $0x10] sm:$0xff] %vm946, %v916
          %950 = vst.msk [vmem:[#allocation3 + $0x18] sm:$0xff] %vm946, %v917
          %951 = vst.msk [vmem:[#allocation4] sm:$0xff] %vm946, %v926
          %952 = vst.msk [vmem:[#allocation4 + $0x8] sm:$0xff] %vm946, %v927
          %953 = vst.msk [vmem:[#allocation4 + $0x10] sm:$0xff] %vm946, %v928
          %954 = vst.msk [vmem:[#allocation4 + $0x18] sm:$0xff] %vm946, %v929
          %v955 = vld [vmem:[%s10] sm:$0xff]
          %v956 = vld [vmem:[%s10 + $0x8] sm:$0xff]
          %v957 = vld [vmem:[%s10 + $0x10] sm:$0xff]
          %v958 = vld [vmem:[%s10 + $0x18] sm:$0xff]
          %v959 = vadd.f32 %v955, %v938
          %v960 = vadd.f32 %v956, %v939
          %v961 = vadd.f32 %v957, %v940
          %v962 = vadd.f32 %v958, %v941
          %963 = vst.msk [vmem:[#allocation2] sm:$0xff] %vm946, %v959
          %964 = vst.msk [vmem:[#allocation2 + $0x8] sm:$0xff] %vm946, %v960
          %965 = vst.msk [vmem:[#allocation2 + $0x10] sm:$0xff] %vm946, %v961
          %966 = vst.msk [vmem:[#allocation2 + $0x18] sm:$0xff] %vm946, %v962
        $region96: #{tpu_custom_call.1} parent=63 // pred_fallthru
          _
        %p967 = scmp.gt.s32.totalorder %s38, 0
        // Predicated region
        $region97: #{tpu_custom_call.1} parent=63 // pred_check
          %p968 = pneg %p967
        $region98: #{tpu_custom_call.1} parent=63 // pred_check_branch
          %970 = sbr.rel (%p968) target = $region100
        $region99: #{tpu_custom_call.1} parent=63 // pred_region
          %v971 = vld [vmem:[#allocation3] sm:$0xff]
          %v972 = vld [vmem:[#allocation3 + $0x8] sm:$0xff]
          %v973 = vld [vmem:[#allocation3 + $0x10] sm:$0xff]
          %v974 = vld [vmem:[#allocation3 + $0x18] sm:$0xff]
          %v975 = vadd.f32 %v971, %v914
          %v976 = vadd.f32 %v972, %v915
          %v977 = vadd.f32 %v973, %v916
          %v978 = vadd.f32 %v974, %v917
          %vm979 = vcmask 261120
          %980 = vst.msk [vmem:[#allocation3] sm:$0xff] %vm979, %v975
          %981 = vst.msk [vmem:[#allocation3 + $0x8] sm:$0xff] %vm979, %v976
          %982 = vst.msk [vmem:[#allocation3 + $0x10] sm:$0xff] %vm979, %v977
          %983 = vst.msk [vmem:[#allocation3 + $0x18] sm:$0xff] %vm979, %v978
          %v984 = vld [vmem:[#allocation4] sm:$0xff]
          %v985 = vld [vmem:[#allocation4 + $0x8] sm:$0xff]
          %v986 = vld [vmem:[#allocation4 + $0x10] sm:$0xff]
          %v987 = vld [vmem:[#allocation4 + $0x18] sm:$0xff]
          %v988 = vadd.f32 %v984, %v926
          %v989 = vadd.f32 %v985, %v927
          %v990 = vadd.f32 %v986, %v928
          %v991 = vadd.f32 %v987, %v929
          %992 = vst.msk [vmem:[#allocation4] sm:$0xff] %vm979, %v988
          %993 = vst.msk [vmem:[#allocation4 + $0x8] sm:$0xff] %vm979, %v989
          %994 = vst.msk [vmem:[#allocation4 + $0x10] sm:$0xff] %vm979, %v990
          %995 = vst.msk [vmem:[#allocation4 + $0x18] sm:$0xff] %vm979, %v991
          %v996 = vld [vmem:[#allocation2] sm:$0xff]
          %v997 = vld [vmem:[#allocation2 + $0x8] sm:$0xff]
          %v998 = vld [vmem:[#allocation2 + $0x10] sm:$0xff]
          %v999 = vld [vmem:[#allocation2 + $0x18] sm:$0xff]
          %v1000 = vadd.f32 %v996, %v938
          %v1001 = vadd.f32 %v997, %v939
          %v1002 = vadd.f32 %v998, %v940
          %v1003 = vadd.f32 %v999, %v941
          %1004 = vst.msk [vmem:[#allocation2] sm:$0xff] %vm979, %v1000
          %1005 = vst.msk [vmem:[#allocation2 + $0x8] sm:$0xff] %vm979, %v1001
          %1006 = vst.msk [vmem:[#allocation2 + $0x10] sm:$0xff] %vm979, %v1002
          %1007 = vst.msk [vmem:[#allocation2 + $0x18] sm:$0xff] %vm979, %v1003
        $region100: #{tpu_custom_call.1} parent=63 // pred_fallthru
          _
        %p1008 = scmp.eq.s32.totalorder %s38, 3
        // Predicated region
        $region101: #{tpu_custom_call.1} parent=63 // pred_check
          %p1009 = pneg %p1008
        $region102: #{tpu_custom_call.1} parent=63 // pred_check_branch
          %1011 = sbr.rel (%p1009) target = $region104
        $region103: #{tpu_custom_call.1} parent=63 // pred_region
          %v1012 = vld [vmem:[#allocation2] sm:$0xff]
          %v1013 = vld [vmem:[#allocation2 + $0x8] sm:$0xff]
          %v1014 = vld [vmem:[#allocation2 + $0x10] sm:$0xff]
          %v1015 = vld [vmem:[#allocation2 + $0x18] sm:$0xff]
          %v1016 = vrcp.pop %v1012
          %v1017 = vrcp.pop %v1013
          %v1018 = vrcp.pop %v1014
          %v1019 = vrcp.pop %v1015
          %v1020 = vld [vmem:[#allocation3] sm:$0xff]
          %v1021 = vld [vmem:[#allocation3 + $0x8] sm:$0xff]
          %v1022 = vld [vmem:[#allocation3 + $0x10] sm:$0xff]
          %v1023 = vld [vmem:[#allocation3 + $0x18] sm:$0xff]
          %v1024 = vmul.f32 %v1020, %v1016
          %v1025 = vmul.f32 %v1021, %v1017
          %v1026 = vmul.f32 %v1022, %v1018
          %v1027 = vmul.f32 %v1023, %v1019
          %v1028 = vld [vmem:[#allocation4] sm:$0xff]
          %v1029 = vld [vmem:[#allocation4 + $0x8] sm:$0xff]
          %v1030 = vld [vmem:[#allocation4 + $0x10] sm:$0xff]
          %v1031 = vld [vmem:[#allocation4 + $0x18] sm:$0xff]
          %v1032 = vmul.f32 %v1028, %v1016
          %v1033 = vmul.f32 %v1029, %v1017
          %v1034 = vmul.f32 %v1030, %v1018
          %v1035 = vmul.f32 %v1031, %v1019
          %v1036 = vpack.c.bf16 %v1025, %v1024
          %v1037 = vpack.c.bf16 %v1027, %v1026
          %v1038 = vpack.c.bf16 %v1033, %v1032
          %v1039 = vpack.c.bf16 %v1035, %v1034
          %v1040 = vld [vmem:[%s7] sm:$0xf]
          %v1041 = vld [vmem:[%s7 + $0x4] sm:$0xf]
          %v1042 = vld [vmem:[%s7 + $0x8] sm:$0xf]
          %v1043 = vld [vmem:[%s7 + $0xc] sm:$0xf]
          %v1048 = vunpack.c.l.b16 %v1040
          %v1049 = vunpack.c.l.b16 %v1041
          %v1050 = vunpack.c.l.b16 %v1042
          %v1051 = vunpack.c.l.b16 %v1043
          %v1052 = vpack.c.b16 %v1049, %v1048
          %v1053 = vpack.c.b16 %v1051, %v1050
          %vm1054 = vcmask 261120
          %v1056 = vsel %vm1054, %v1052, 0
          %v1059 = vsel %vm1054, %v1053, 0
          %1061 = vmatprep.subr.bf16.mxu0 0
          %1062 = vmatpush1.bf16.msra.mxu0 %v1036
          %1063 = vmatprep.subr.bf16.mxu0 0
          %1064 = vmatpush1.bf16.msra.mxu0 %v1037
          %1065 = vmatprep.subr.bf16.mxu0 0
          %1066 = vmatpush1.bf16.msra.mxu0 0
          %1067 = vmatprep.subr.bf16.mxu0 0
          %1068 = vmatpush1.bf16.msra.mxu0 0
          %1069 = vmatprep.subr.bf16.mxu0 0
          %1070 = vmatpush1.bf16.msra.mxu0 0
          %1071 = vmatprep.subr.bf16.mxu0 0
          %1072 = vmatpush1.bf16.msra.mxu0 0
          %1073 = vmatprep.subr.bf16.mxu0 0
          %1074 = vmatpush1.bf16.msra.mxu0 0
          %1075 = vmatprep.subr.bf16.mxu0 0
          %1076 = vmatpush1.bf16.msra.mxu0 0
          %1077 = vmatprep.subr.bf16.mxu0 0
          %1078 = vmatpush1.bf16.msra.mxu0 0
          %1079 = vmatprep.subr.bf16.mxu0 0
          %1080 = vmatpush1.bf16.msra.mxu0 0
          %1081 = vmatprep.subr.bf16.mxu0 0
          %1082 = vmatpush1.bf16.msra.mxu0 0
          %1083 = vmatprep.subr.bf16.mxu0 0
          %1084 = vmatpush1.bf16.msra.mxu0 0
          %1085 = vmatprep.subr.bf16.mxu0 0
          %1086 = vmatpush1.bf16.msra.mxu0 0
          %1087 = vmatprep.subr.bf16.mxu0 0
          %1088 = vmatpush1.bf16.msra.mxu0 0
          %1089 = vmatprep.subr.bf16.mxu0 0
          %1090 = vmatpush1.bf16.msra.mxu0 0
          %1091 = vmatprep.subr.bf16.mxu0 0
          %1092 = vmatpush1.bf16.msra.mxu0 0
          %1093 = vmatprep.mubr.bf16.mxu0 0
          %1094 = vmatmul.mubr.bf16.gmra.mrb[0].mxu0 %v1056
          %v1095 = vpop.f32.mrb[0].mxu0
          %v1096 = vadd.f32 0.0, %v1095
          %v1097 = vpop.f32.mrb[0].mxu0
          %v1098 = vpop.f32.mrb[0].mxu0
          %v1099 = vadd.f32 0.0, %v1098
          %v1100 = vpop.f32.mrb[0].mxu0
          %1101 = vmatprep.mubr.bf16.mxu0 0
          %1102 = vmatmul.mubr.bf16.gmra.mrb[0].mxu0 %v1059
          %v1103 = vpop.f32.mrb[0].mxu0
          %v1104 = vadd.f32 0.0, %v1103
          %v1105 = vpop.f32.mrb[0].mxu0
          %v1106 = vpop.f32.mrb[0].mxu0
          %v1107 = vadd.f32 0.0, %v1106
          %v1108 = vpop.f32.mrb[0].mxu0
          %1109 = vdwg.mxu0
          %1110 = vmatprep.subr.bf16.mxu0 0
          %1111 = vmatpush1.bf16.msra.mxu0 %v1038
          %1112 = vmatprep.subr.bf16.mxu0 0
          %1113 = vmatpush1.bf16.msra.mxu0 %v1039
          %1114 = vmatprep.subr.bf16.mxu0 0
          %1115 = vmatpush1.bf16.msra.mxu0 0
          %1116 = vmatprep.subr.bf16.mxu0 0
          %1117 = vmatpush1.bf16.msra.mxu0 0
          %1118 = vmatprep.subr.bf16.mxu0 0
          %1119 = vmatpush1.bf16.msra.mxu0 0
          %1120 = vmatprep.subr.bf16.mxu0 0
          %1121 = vmatpush1.bf16.msra.mxu0 0
          %1122 = vmatprep.subr.bf16.mxu0 0
          %1123 = vmatpush1.bf16.msra.mxu0 0
          %1124 = vmatprep.subr.bf16.mxu0 0
          %1125 = vmatpush1.bf16.msra.mxu0 0
          %1126 = vmatprep.subr.bf16.mxu0 0
          %1127 = vmatpush1.bf16.msra.mxu0 0
          %1128 = vmatprep.subr.bf16.mxu0 0
          %1129 = vmatpush1.bf16.msra.mxu0 0
          %1130 = vmatprep.subr.bf16.mxu0 0
          %1131 = vmatpush1.bf16.msra.mxu0 0
          %1132 = vmatprep.subr.bf16.mxu0 0
          %1133 = vmatpush1.bf16.msra.mxu0 0
          %1134 = vmatprep.subr.bf16.mxu0 0
          %1135 = vmatpush1.bf16.msra.mxu0 0
          %1136 = vmatprep.subr.bf16.mxu0 0
          %1137 = vmatpush1.bf16.msra.mxu0 0
          %1138 = vmatprep.subr.bf16.mxu0 0
          %1139 = vmatpush1.bf16.msra.mxu0 0
          %1140 = vmatprep.subr.bf16.mxu0 0
          %1141 = vmatpush1.bf16.msra.mxu0 0
          %1142 = vmatprep.mubr.bf16.mxu0 0
          %1143 = vmatmul.mubr.bf16.gmra.mrb[0].mxu0 %v1056
          %v1144 = vpop.f32.mrb[0].mxu0
          %v1145 = vadd.f32 0.0, %v1144
          %v1146 = vpop.f32.mrb[0].mxu0
          %v1147 = vpop.f32.mrb[0].mxu0
          %v1148 = vadd.f32 0.0, %v1147
          %v1149 = vpop.f32.mrb[0].mxu0
          %1150 = vmatprep.mubr.bf16.mxu0 0
          %1151 = vmatmul.mubr.bf16.gmra.mrb[0].mxu0 %v1059
          %v1152 = vpop.f32.mrb[0].mxu0
          %v1153 = vadd.f32 0.0, %v1152
          %v1154 = vpop.f32.mrb[0].mxu0
          %v1155 = vpop.f32.mrb[0].mxu0
          %v1156 = vadd.f32 0.0, %v1155
          %v1157 = vpop.f32.mrb[0].mxu0
          %1158 = vdwg.mxu0
          %v1159 = vsub.f32 %v1096, %v1153
          %v1160 = vsub.f32 %v1099, %v1156
          %v1161 = vadd.f32 %v1145, %v1104
          %v1162 = vadd.f32 %v1148, %v1107
          %v1163 = vpack.c.bf16 %v1160, %v1159
          %v1164 = vld [vmem:[%s8] sm:$0xf]
          %v1165 = vld [vmem:[%s8 + $0x4] sm:$0xf]
          %v1166 = vld [vmem:[%s8 + $0x8] sm:$0xf]
          %v1167 = vld [vmem:[%s8 + $0xc] sm:$0xf]
          %v1172 = vunpack.c.l.b16 %v1164
          %v1173 = vunpack.c.l.b16 %v1165
          %v1174 = vunpack.c.l.b16 %v1166
          %v1175 = vunpack.c.l.b16 %v1167
          %v1176 = vpack.c.b16 %v1173, %v1172
          %v1177 = vpack.c.b16 %v1175, %v1174
          %v1181 = vsel %vm1054, %v1163, 0
          %1183 = vmatprep.subr.bf16.mxu0 0
          %1184 = vmatpush1.bf16.msra.mxu0 %v1176
          %1185 = vmatprep.subr.bf16.mxu0 0
          %1186 = vmatpush1.bf16.msra.mxu0 %v1177
          %1187 = vmatprep.subr.bf16.mxu0 0
          %1188 = vmatpush1.bf16.msra.mxu0 0
          %1189 = vmatprep.subr.bf16.mxu0 0
          %1190 = vmatpush1.bf16.msra.mxu0 0
          %1191 = vmatprep.subr.bf16.mxu0 0
          %1192 = vmatpush1.bf16.msra.mxu0 0
          %1193 = vmatprep.subr.bf16.mxu0 0
          %1194 = vmatpush1.bf16.msra.mxu0 0
          %1195 = vmatprep.subr.bf16.mxu0 0
          %1196 = vmatpush1.bf16.msra.mxu0 0
          %1197 = vmatprep.subr.bf16.mxu0 0
          %1198 = vmatpush1.bf16.msra.mxu0 0
          %1199 = vmatprep.subr.bf16.mxu0 0
          %1200 = vmatpush1.bf16.msra.mxu0 0
          %1201 = vmatprep.subr.bf16.mxu0 0
          %1202 = vmatpush1.bf16.msra.mxu0 0
          %1203 = vmatprep.subr.bf16.mxu0 0
          %1204 = vmatpush1.bf16.msra.mxu0 0
          %1205 = vmatprep.subr.bf16.mxu0 0
          %1206 = vmatpush1.bf16.msra.mxu0 0
          %1207 = vmatprep.subr.bf16.mxu0 0
          %1208 = vmatpush1.bf16.msra.mxu0 0
          %1209 = vmatprep.subr.bf16.mxu0 0
          %1210 = vmatpush1.bf16.msra.mxu0 0
          %1211 = vmatprep.subr.bf16.mxu0 0
          %1212 = vmatpush1.bf16.msra.mxu0 0
          %1213 = vmatprep.subr.bf16.mxu0 0
          %1214 = vmatpush1.bf16.msra.mxu0 0
          %1215 = vmatprep.mubr.bf16.mxu0 0
          %1216 = vmatmul.mubr.bf16.gmra.mrb[0].mxu0 %v1181
          %v1217 = vpop.f32.mrb[0].mxu0
          %v1218 = vadd.f32 0.0, %v1217
          %v1219 = vpop.f32.mrb[0].mxu0
          %v1220 = vpop.f32.mrb[0].mxu0
          %v1221 = vadd.f32 0.0, %v1220
          %v1222 = vpop.f32.mrb[0].mxu0
          %1223 = vdwg.mxu0
          %v1224 = vpack.c.bf16 %v1162, %v1161
          %v1225 = vld [vmem:[#allocation16] sm:$0xf]
          %v1226 = vld [vmem:[#allocation16 + $0x4] sm:$0xf]
          %v1227 = vld [vmem:[#allocation16 + $0x8] sm:$0xf]
          %v1228 = vld [vmem:[#allocation16 + $0xc] sm:$0xf]
          %v1233 = vunpack.c.l.b16 %v1225
          %v1234 = vunpack.c.l.b16 %v1226
          %v1235 = vunpack.c.l.b16 %v1227
          %v1236 = vunpack.c.l.b16 %v1228
          %v1237 = vpack.c.b16 %v1234, %v1233
          %v1238 = vpack.c.b16 %v1236, %v1235
          %v1242 = vsel %vm1054, %v1224, 0
          %1244 = vmatprep.subr.bf16.mxu0 0
          %1245 = vmatpush1.bf16.msra.mxu0 %v1237
          %1246 = vmatprep.subr.bf16.mxu0 0
          %1247 = vmatpush1.bf16.msra.mxu0 %v1238
          %1248 = vmatprep.subr.bf16.mxu0 0
          %1249 = vmatpush1.bf16.msra.mxu0 0
          %1250 = vmatprep.subr.bf16.mxu0 0
          %1251 = vmatpush1.bf16.msra.mxu0 0
          %1252 = vmatprep.subr.bf16.mxu0 0
          %1253 = vmatpush1.bf16.msra.mxu0 0
          %1254 = vmatprep.subr.bf16.mxu0 0
          %1255 = vmatpush1.bf16.msra.mxu0 0
          %1256 = vmatprep.subr.bf16.mxu0 0
          %1257 = vmatpush1.bf16.msra.mxu0 0
          %1258 = vmatprep.subr.bf16.mxu0 0
          %1259 = vmatpush1.bf16.msra.mxu0 0
          %1260 = vmatprep.subr.bf16.mxu0 0
          %1261 = vmatpush1.bf16.msra.mxu0 0
          %1262 = vmatprep.subr.bf16.mxu0 0
          %1263 = vmatpush1.bf16.msra.mxu0 0
          %1264 = vmatprep.subr.bf16.mxu0 0
          %1265 = vmatpush1.bf16.msra.mxu0 0
          %1266 = vmatprep.subr.bf16.mxu0 0
          %1267 = vmatpush1.bf16.msra.mxu0 0
          %1268 = vmatprep.subr.bf16.mxu0 0
          %1269 = vmatpush1.bf16.msra.mxu0 0
          %1270 = vmatprep.subr.bf16.mxu0 0
          %1271 = vmatpush1.bf16.msra.mxu0 0
          %1272 = vmatprep.subr.bf16.mxu0 0
          %1273 = vmatpush1.bf16.msra.mxu0 0
          %1274 = vmatprep.subr.bf16.mxu0 0
          %1275 = vmatpush1.bf16.msra.mxu0 0
          %1276 = vmatprep.mubr.bf16.mxu0 0
          %1277 = vmatmul.mubr.bf16.gmra.mrb[0].mxu0 %v1242
          %v1278 = vpop.f32.mrb[0].mxu0
          %v1279 = vadd.f32 0.0, %v1278
          %v1280 = vpop.f32.mrb[0].mxu0
          %v1281 = vpop.f32.mrb[0].mxu0
          %v1282 = vadd.f32 0.0, %v1281
          %v1283 = vpop.f32.mrb[0].mxu0
          %1284 = vdwg.mxu0
          %v1285 = vsub.f32 %v1218, %v1279
          %v1286 = vsub.f32 %v1221, %v1282
          %1287 = vst [vmem:[%s563] sm:$0xff] %v1285
          %1288 = vst [vmem:[%s563 + $0x8] sm:$0xff] %v1286
        $region104: #{tpu_custom_call.1} parent=63 // pred_fallthru
          _
        %s1289 = sand.u32 %s305, 1
        %s1290 = scalar_lea.sflag [#allocation7], %s1289
        %s1291 = sand.u32 %s305, 1
        %s1292 = smul.addr %s1291, 16
        %s1293 = scalar_lea.vmem [#allocation17], %s1292
        // Predicated region
        $region105: #{tpu_custom_call.1} parent=63 // pred_check
          %p1294 = pneg %p315
        $region106: #{tpu_custom_call.1} parent=63 // pred_check_branch
          %1296 = sbr.rel (%p1294) target = $region108
        $region107: #{tpu_custom_call.1} parent=63 // pred_region
          %s1298 = ssub.s32 256, 256
          %1299 = vsyncadd %s1290, %s1298
          %s1300 = smul.addr %s37, 2
          %s1301 = smul.addr %s1300, 128
          %s1302 = scalar_lea.hbm %s11, %s1301
          %s1303 = sshll.u32 %s1293, 4
          %s1304 = int_to_ptr.vmem [resolvable:$true] %s1303
          %1309 = dma.vmem_to_hbm [thread:$0]  %s1304, 256, %s1302, %s1290, 128, 128, 8
        $region108: #{tpu_custom_call.1} parent=63 // pred_fallthru
          _
      $region64: #{tpu_custom_call.1} parent=5 // pred_fallthru
        _
      %p1310 = scmp.le.s32.totalorder 2, %s28
      // Predicated region
      $region109: #{tpu_custom_call.1} parent=5 // pred_check
        %p1311 = pneg %p1310
      $region110: #{tpu_custom_call.1} parent=5 // pred_check_branch
        %1313 = sbr.rel (%p1311) target = $region112
      $region111: #{tpu_custom_call.1} parent=5 // pred_region
        %s1314 = ssub.s32 %s28, 2
        // Predicated region
        $region113: #{tpu_custom_call.1} parent=111 // pred_check
          %p1315 = pneg %p321
        $region114: #{tpu_custom_call.1} parent=111 // pred_check_branch
          %1317 = sbr.rel (%p1315) target = $region116
        $region115: #{tpu_custom_call.1} parent=111 // pred_region
          %s1318 = sand.u32 %s306, 1
          %s1319 = scalar_lea.sflag [#allocation7], %s1318
          %s1320 = sand.u32 %s306, 1
          %s1321 = smul.addr %s1320, 16
          %s1322 = scalar_lea.vmem [#allocation17], %s1321
          %1323 = dma.done %s1319, 256
        $region116: #{tpu_custom_call.1} parent=111 // pred_fallthru
          _
      $region112: #{tpu_custom_call.1} parent=5 // pred_fallthru
        _
    $region6: #{tpu_custom_call.1} parent=1 // loop_footer
      %s32 = sadd.s32 1, %s28
    $region7: #{tpu_custom_call.1} parent=1 // loop_footer_branch
      %27 = sbr.rel target = $region3
    $region8: #{tpu_custom_call.1} parent=1 // loop_exit
      _
    %1324 = vsyncpa [#allocation6], 1
    %s1325 = scalar_lea.sflag [#allocation6], 1
    %1326 = vsyncpa %s1325, 1
    %1327 = vsyncpa [#allocation9], 1
    %s1328 = scalar_lea.sflag [#allocation9], 1
    %1329 = vsyncpa %s1328, 1
    %1330 = vsyncpa [#allocation12], 1
    %1331 = vsyncpa [#allocation15], 1
    %1332 = vsyncpa [#allocation7], 1
    %s1333 = scalar_lea.sflag [#allocation7], 1
    %1334 = vsyncpa %s1333, 1

</llo_original>
